<compile_context>
chip_gen: v7x
topology: tpu7x:2x2x1
jax: 0.10.0
libtpu: 0.0.40
codegen_flags: <defaults>
</compile_context>

<pallas_src>
import jax
import jax.numpy as jnp
from jax.experimental import pallas as pl
from jax.experimental.pallas import tpu as pltpu

_VMEM_LIMIT = 32 * 1024 * 1024  # safe on v5e/v6e (128 MiB) and v7x (64 MiB)


# ---------------------------------------------------------------------------
# Kernel 1/2: fused conv (as transposed im2col GEMM) + 2x2 maxpool + relu
#   p_ref : [1, 4, K, S]   4 pooling-phase patch matrices (bf16)
#   w_ref : [Cout, K]      reshaped conv weight (bf16)
#   b_ref : [Cout, 1]      bias (f32)
#   o_ref : [1, Cout, S]   pooled+relu'd feature map, channel-major (bf16)
# ---------------------------------------------------------------------------
def _conv_pool_relu_kernel(p_ref, w_ref, b_ref, o_ref):
    w = w_ref[...]
    # maxpool over the 4 phases == maxpool of the conv output (bias is a
    # per-channel constant, so it can be added after the max).
    z = jnp.dot(w, p_ref[0, 0], preferred_element_type=jnp.float32)
    for ph in range(1, 4):
        z = jnp.maximum(
            z, jnp.dot(w, p_ref[0, ph], preferred_element_type=jnp.float32))
    z = jnp.maximum(z + b_ref[...], 0.0)          # relu(maxpool(conv)+b)
    o_ref[0] = z.astype(o_ref.dtype)


def conv_pool_relu(patches, w, b):
    """patches [B,4,K,S] bf16, w [Cout,K] bf16, b [Cout,1] f32 -> [B,Cout,S] bf16."""
    B, P, K, S = patches.shape
    Cout = w.shape[0]
    return pl.pallas_call(
        _conv_pool_relu_kernel,
        grid=(B,),
        in_specs=[
            pl.BlockSpec((1, P, K, S), lambda i: (i, 0, 0, 0)),
            pl.BlockSpec((Cout, K), lambda i: (0, 0)),
            pl.BlockSpec((Cout, 1), lambda i: (0, 0)),
        ],
        out_specs=pl.BlockSpec((1, Cout, S), lambda i: (i, 0, 0)),
        out_shape=jax.ShapeDtypeStruct((B, Cout, S), jnp.bfloat16),
        compiler_params=pltpu.CompilerParams(
            dimension_semantics=("parallel",),
            vmem_limit_bytes=_VMEM_LIMIT),
    )(patches, w, b)


# ---------------------------------------------------------------------------
# Kernel 3: fused fc1 + relu + fc2 + log_softmax
#   x_ref  : [bt, 320] bf16
#   w1_ref : [320, 50] bf16,  b1_ref : [1, 50] f32
#   w2_ref : [50, 10]  f32,   b2_ref : [1, 10] f32
#   o_ref  : [bt, 10]  f32
# ---------------------------------------------------------------------------
def _fc_tail_kernel(x_ref, w1_ref, b1_ref, w2_ref, b2_ref, o_ref):
    h = jnp.dot(x_ref[...], w1_ref[...], preferred_element_type=jnp.float32)
    h = jnp.maximum(h + b1_ref[...], 0.0)
    # TODO(synk): F.dropout identity here (eval-mode semantics).
    z = jnp.dot(h, w2_ref[...], preferred_element_type=jnp.float32) + b2_ref[...]
    z = z - jnp.max(z, axis=-1, keepdims=True)
    z = z - jnp.log(jnp.sum(jnp.exp(z), axis=-1, keepdims=True))
    o_ref[...] = z.astype(o_ref.dtype)


def fc_tail(x, w1, b1, w2, b2):
    B, K = x.shape
    H = w1.shape[1]
    N = w2.shape[1]
    bt = B if B <= 128 else 128
    assert B % bt == 0, "batch must be a multiple of the fc batch tile"
    return pl.pallas_call(
        _fc_tail_kernel,
        grid=(B // bt,),
        in_specs=[
            pl.BlockSpec((bt, K), lambda i: (i, 0)),
            pl.BlockSpec((K, H), lambda i: (0, 0)),
            pl.BlockSpec((1, H), lambda i: (0, 0)),
            pl.BlockSpec((H, N), lambda i: (0, 0)),
            pl.BlockSpec((1, N), lambda i: (0, 0)),
        ],
        out_specs=pl.BlockSpec((bt, N), lambda i: (i, 0)),
        out_shape=jax.ShapeDtypeStruct((B, N), jnp.float32),
        compiler_params=pltpu.CompilerParams(
            dimension_semantics=("parallel",),
            vmem_limit_bytes=_VMEM_LIMIT),
    )(x, w1, b1, w2, b2)


# ---------------------------------------------------------------------------
# Glue (pure data movement / slicing, no compute):
# build the 4 pooling-phase im2col patch matrices for a valid kxk conv whose
# output is immediately 2x2/stride-2 max-pooled.
#   x [B, C, H, W] -> [B, 4, C*k*k, (OH//2)*(OW//2)]
#   entry [b, (ph,pw), c*k*k + kh*k + kw, oh*PW + ow]
#       = x[b, c, 2*oh + ph + kh, 2*ow + pw + kw]
# ---------------------------------------------------------------------------
def _pool_phase_patches(x, k):
    B, C, H, W = x.shape
    OH, OW = H - k + 1, W - k + 1
    PH, PW = OH // 2, OW // 2
    taps = jnp.stack(
        [x[:, :, kh:kh + OH, kw:kw + OW] for kh in range(k) for kw in range(k)],
        axis=2)                                            # [B, C, k*k, OH, OW]
    phases = jnp.stack(
        [taps[:, :, :, ph::2, pw::2] for ph in range(2) for pw in range(2)],
        axis=1)                                            # [B, 4, C, k*k, PH, PW]
    return phases.reshape(B, 4, C * k * k, PH * PW)


# ---------------------------------------------------------------------------
# Forward pass (matches Net.forward in eval mode)
# ---------------------------------------------------------------------------
def net_forward(x_nchw, params):
    B = x_nchw.shape[0]
    xf = x_nchw.astype(jnp.bfloat16)                        # [B, 1, 28, 28]

    # conv1(1->10,k5) + maxpool2 + relu  (fused; lane dim = 144 pooled pixels)
    p1 = _pool_phase_patches(xf, 5)                         # [B, 4, 25, 144]
    w1 = params["conv1_w"].reshape(10, 25).astype(jnp.bfloat16)
    b1 = params["conv1_b"].reshape(10, 1).astype(jnp.float32)
    h1 = conv_pool_relu(p1, w1, b1)                         # [B, 10, 144] bf16

    # conv2(10->20,k5) (+ identity Dropout2d) + maxpool2 + relu (fused)
    p2 = _pool_phase_patches(h1.reshape(B, 10, 12, 12), 5)  # [B, 4, 250, 16]
    w2 = params["conv2_w"].reshape(20, 250).astype(jnp.bfloat16)
    b2 = params["conv2_b"].reshape(20, 1).astype(jnp.float32)
    h2 = conv_pool_relu(p2, w2, b2)                         # [B, 20, 16] bf16

    # x.view(-1, 320): channel-major layout already matches PyTorch's (C,H,W)
    # flatten order, so this reshape is free (no runtime transpose).
    flat = h2.reshape(B, 320)

    # fc1 + relu + (identity dropout) + fc2 + log_softmax, one fused kernel
    return fc_tail(
        flat,
        params["fc1_w"].T.astype(jnp.bfloat16),
        params["fc1_b"].reshape(1, 50).astype(jnp.float32),
        params["fc2_w"].T.astype(jnp.float32),
        params["fc2_b"].reshape(1, 10).astype(jnp.float32),
    )


# ---------------------------------------------------------------------------
# Deterministic parameter init (PyTorch default: U(-1/sqrt(fan_in), 1/sqrt(fan_in)))
# ---------------------------------------------------------------------------
def init_params(key):
    ks = jax.random.split(key, 8)

    def u(k, shape, fan_in):
        bound = 1.0 / jnp.sqrt(jnp.float32(fan_in))
        return jax.random.uniform(k, shape, jnp.float32, -bound, bound)

    return {
        "conv1_w": u(ks[0], (10, 1, 5, 5), 1 * 25),
        "conv1_b": u(ks[1], (10,), 1 * 25),
        "conv2_w": u(ks[2], (20, 10, 5, 5), 10 * 25),
        "conv2_b": u(ks[3], (20,), 10 * 25),
        "fc1_w": u(ks[4], (50, 320), 320),
        "fc1_b": u(ks[5], (50,), 320),
        "fc2_w": u(ks[6], (10, 50), 50),
        "fc2_b": u(ks[7], (10,), 50),
    }


if __name__ == "__main__":
    key = jax.random.PRNGKey(0)
    pkey, xkey = jax.random.split(key)
    params = init_params(pkey)
    # NCHW input (PyTorch convention); 28x28 is required by fc1's 320.
    x = jax.random.normal(xkey, (2, 1, 28, 28), jnp.float32)

    out = jax.jit(net_forward)(x, params)
    out = jax.block_until_ready(out)
    assert out.shape == (2, 10)
    assert bool(jnp.all(jnp.isfinite(out)))
    # log_softmax rows should exponentiate-and-sum to ~1
    assert bool(jnp.allclose(jnp.sum(jnp.exp(out), axis=1), 1.0, atol=1e-4))
    print("KERNEL_OK")
</pallas_src>

<mosaic_0001>
module attributes {stable_mosaic.version = 11 : i64} {
  func.func @_conv_pool_relu_kernel(%arg0: i32, %arg1: memref<1x4x25x144xbf16, #tpu.memory_space<vmem>>, %arg2: memref<10x25xbf16, #tpu.memory_space<vmem>>, %arg3: memref<10x1xf32, #tpu.memory_space<vmem>>, %arg4: memref<1x10x144xbf16, #tpu.memory_space<vmem>>) attributes {dimension_semantics = [#tpu.dimension_semantics<parallel>], iteration_bounds = array<i64: 2>, scalar_prefetch = 0 : i64, scratch_operands = 0 : i64, tpu.core_type = #tpu.core_type<tc>, window_params = [{transform_indices = @transform_0, window_bounds = array<i64: 1, 4, 25, 144>}, {pipeline_mode = #tpu.pipeline_mode<synchronous>, transform_indices = @transform_1, window_bounds = array<i64: 10, 25>}, {pipeline_mode = #tpu.pipeline_mode<synchronous>, transform_indices = @transform_2, window_bounds = array<i64: 10, 1>}, {transform_indices = @transform_3, window_bounds = array<i64: 1, 10, 144>}]} {
    %c0 = arith.constant 0 : index
    %c0_0 = arith.constant 0 : index
    %0 = vector.load %arg2[%c0, %c0_0] : memref<10x25xbf16, #tpu.memory_space<vmem>>, vector<10x25xbf16>
    %c0_1 = arith.constant 0 : index
    %c0_2 = arith.constant 0 : index
    %c0_3 = arith.constant 0 : index
    %c0_4 = arith.constant 0 : index
    %1 = vector.load %arg1[%c0_1, %c0_2, %c0_3, %c0_4] : memref<1x4x25x144xbf16, #tpu.memory_space<vmem>>, vector<1x1x25x144xbf16>
    %2 = vector.shape_cast %1 : vector<1x1x25x144xbf16> to vector<25x144xbf16>
    %cst = arith.constant dense<0.000000e+00> : vector<10x144xf32>
    %3 = tpu.matmul %0, %2, %cst {dimension_numbers = #tpu.dot_dimension_numbers<[1], [0], [0], [1], [0, 0, 1, 1], [], []>} : vector<10x25xbf16>, vector<25x144xbf16>, vector<10x144xf32> -> vector<10x144xf32>
    %c0_5 = arith.constant 0 : index
    %c1 = arith.constant 1 : index
    %c0_6 = arith.constant 0 : index
    %c0_7 = arith.constant 0 : index
    %4 = vector.load %arg1[%c0_5, %c1, %c0_6, %c0_7] : memref<1x4x25x144xbf16, #tpu.memory_space<vmem>>, vector<1x1x25x144xbf16>
    %5 = vector.shape_cast %4 : vector<1x1x25x144xbf16> to vector<25x144xbf16>
    %cst_8 = arith.constant dense<0.000000e+00> : vector<10x144xf32>
    %6 = tpu.matmul %0, %5, %cst_8 {dimension_numbers = #tpu.dot_dimension_numbers<[1], [0], [0], [1], [0, 0, 1, 1], [], []>} : vector<10x25xbf16>, vector<25x144xbf16>, vector<10x144xf32> -> vector<10x144xf32>
    %7 = arith.maximumf %3, %6 : vector<10x144xf32>
    %c0_9 = arith.constant 0 : index
    %c2 = arith.constant 2 : index
    %c0_10 = arith.constant 0 : index
    %c0_11 = arith.constant 0 : index
    %8 = vector.load %arg1[%c0_9, %c2, %c0_10, %c0_11] : memref<1x4x25x144xbf16, #tpu.memory_space<vmem>>, vector<1x1x25x144xbf16>
    %9 = vector.shape_cast %8 : vector<1x1x25x144xbf16> to vector<25x144xbf16>
    %cst_12 = arith.constant dense<0.000000e+00> : vector<10x144xf32>
    %10 = tpu.matmul %0, %9, %cst_12 {dimension_numbers = #tpu.dot_dimension_numbers<[1], [0], [0], [1], [0, 0, 1, 1], [], []>} : vector<10x25xbf16>, vector<25x144xbf16>, vector<10x144xf32> -> vector<10x144xf32>
    %11 = arith.maximumf %7, %10 : vector<10x144xf32>
    %c0_13 = arith.constant 0 : index
    %c3 = arith.constant 3 : index
    %c0_14 = arith.constant 0 : index
    %c0_15 = arith.constant 0 : index
    %12 = vector.load %arg1[%c0_13, %c3, %c0_14, %c0_15] : memref<1x4x25x144xbf16, #tpu.memory_space<vmem>>, vector<1x1x25x144xbf16>
    %13 = vector.shape_cast %12 : vector<1x1x25x144xbf16> to vector<25x144xbf16>
    %cst_16 = arith.constant dense<0.000000e+00> : vector<10x144xf32>
    %14 = tpu.matmul %0, %13, %cst_16 {dimension_numbers = #tpu.dot_dimension_numbers<[1], [0], [0], [1], [0, 0, 1, 1], [], []>} : vector<10x25xbf16>, vector<25x144xbf16>, vector<10x144xf32> -> vector<10x144xf32>
    %15 = arith.maximumf %11, %14 : vector<10x144xf32>
    %c0_17 = arith.constant 0 : index
    %c0_18 = arith.constant 0 : index
    %16 = vector.load %arg3[%c0_17, %c0_18] : memref<10x1xf32, #tpu.memory_space<vmem>>, vector<10x1xf32>
    %17 = vector.broadcast %16 : vector<10x1xf32> to vector<10x144xf32>
    %18 = arith.addf %15, %17 : vector<10x144xf32>
    %cst_19 = arith.constant 0.000000e+00 : f32
    %19 = vector.broadcast %cst_19 : f32 to vector<10x144xf32>
    %20 = arith.maximumf %18, %19 : vector<10x144xf32>
    %21 = arith.truncf %20 : vector<10x144xf32> to vector<10x144xbf16>
    %c0_20 = arith.constant 0 : index
    %c0_21 = arith.constant 0 : index
    %c0_22 = arith.constant 0 : index
    %22 = vector.load %arg4[%c0_20, %c0_21, %c0_22] : memref<1x10x144xbf16, #tpu.memory_space<vmem>>, vector<1x10x144xbf16>
    %23 = vector.shape_cast %22 : vector<1x10x144xbf16> to vector<10x144xbf16>
    %24 = vector.shape_cast %21 : vector<10x144xbf16> to vector<1x10x144xbf16>
    tpu.vector_store %arg4[%c0_20, %c0_21, %c0_22], %24 {strides = array<i32>} : memref<1x10x144xbf16, #tpu.memory_space<vmem>>, vector<1x10x144xbf16>,
    return
  }
  func.func @transform_0(%arg0: i32) -> (i32, i32, i32, i32) {
    %c0_i32 = arith.constant 0 : i32
    %c0_i32_0 = arith.constant 0 : i32
    %c0_i32_1 = arith.constant 0 : i32
    %c0_i32_2 = arith.constant 0 : i32
    return %arg0, %c0_i32, %c0_i32_0, %c0_i32_1 : i32, i32, i32, i32
  }
  func.func @transform_1(%arg0: i32) -> (i32, i32) {
    %c0_i32 = arith.constant 0 : i32
    %c0_i32_0 = arith.constant 0 : i32
    %c0_i32_1 = arith.constant 0 : i32
    return %c0_i32, %c0_i32_0 : i32, i32
  }
  func.func @transform_2(%arg0: i32) -> (i32, i32) {
    %c0_i32 = arith.constant 0 : i32
    %c0_i32_0 = arith.constant 0 : i32
    %c0_i32_1 = arith.constant 0 : i32
    return %c0_i32, %c0_i32_0 : i32, i32
  }
  func.func @transform_3(%arg0: i32) -> (i32, i32, i32) {
    %c0_i32 = arith.constant 0 : i32
    %c0_i32_0 = arith.constant 0 : i32
    %c0_i32_1 = arith.constant 0 : i32
    return %arg0, %c0_i32, %c0_i32_0 : i32, i32, i32
  }
}

module attributes {stable_mosaic.version = 11 : i64} {
  func.func @_conv_pool_relu_kernel(%arg0: i32, %arg1: memref<1x4x250x16xbf16, #tpu.memory_space<vmem>>, %arg2: memref<20x250xbf16, #tpu.memory_space<vmem>>, %arg3: memref<20x1xf32, #tpu.memory_space<vmem>>, %arg4: memref<1x20x16xbf16, #tpu.memory_space<vmem>>) attributes {dimension_semantics = [#tpu.dimension_semantics<parallel>], iteration_bounds = array<i64: 2>, scalar_prefetch = 0 : i64, scratch_operands = 0 : i64, tpu.core_type = #tpu.core_type<tc>, window_params = [{transform_indices = @transform_0, window_bounds = array<i64: 1, 4, 250, 16>}, {pipeline_mode = #tpu.pipeline_mode<synchronous>, transform_indices = @transform_1, window_bounds = array<i64: 20, 250>}, {pipeline_mode = #tpu.pipeline_mode<synchronous>, transform_indices = @transform_2, window_bounds = array<i64: 20, 1>}, {transform_indices = @transform_3, window_bounds = array<i64: 1, 20, 16>}]} {
    %c0 = arith.constant 0 : index
    %c0_0 = arith.constant 0 : index
    %0 = vector.load %arg2[%c0, %c0_0] : memref<20x250xbf16, #tpu.memory_space<vmem>>, vector<20x250xbf16>
    %c0_1 = arith.constant 0 : index
    %c0_2 = arith.constant 0 : index
    %c0_3 = arith.constant 0 : index
    %c0_4 = arith.constant 0 : index
    %1 = vector.load %arg1[%c0_1, %c0_2, %c0_3, %c0_4] : memref<1x4x250x16xbf16, #tpu.memory_space<vmem>>, vector<1x1x250x16xbf16>
    %2 = vector.shape_cast %1 : vector<1x1x250x16xbf16> to vector<250x16xbf16>
    %cst = arith.constant dense<0.000000e+00> : vector<20x16xf32>
    %3 = tpu.matmul %0, %2, %cst {dimension_numbers = #tpu.dot_dimension_numbers<[1], [0], [0], [1], [0, 0, 1, 1], [], []>} : vector<20x250xbf16>, vector<250x16xbf16>, vector<20x16xf32> -> vector<20x16xf32>
    %c0_5 = arith.constant 0 : index
    %c1 = arith.constant 1 : index
    %c0_6 = arith.constant 0 : index
    %c0_7 = arith.constant 0 : index
    %4 = vector.load %arg1[%c0_5, %c1, %c0_6, %c0_7] : memref<1x4x250x16xbf16, #tpu.memory_space<vmem>>, vector<1x1x250x16xbf16>
    %5 = vector.shape_cast %4 : vector<1x1x250x16xbf16> to vector<250x16xbf16>
    %cst_8 = arith.constant dense<0.000000e+00> : vector<20x16xf32>
    %6 = tpu.matmul %0, %5, %cst_8 {dimension_numbers = #tpu.dot_dimension_numbers<[1], [0], [0], [1], [0, 0, 1, 1], [], []>} : vector<20x250xbf16>, vector<250x16xbf16>, vector<20x16xf32> -> vector<20x16xf32>
    %7 = arith.maximumf %3, %6 : vector<20x16xf32>
    %c0_9 = arith.constant 0 : index
    %c2 = arith.constant 2 : index
    %c0_10 = arith.constant 0 : index
    %c0_11 = arith.constant 0 : index
    %8 = vector.load %arg1[%c0_9, %c2, %c0_10, %c0_11] : memref<1x4x250x16xbf16, #tpu.memory_space<vmem>>, vector<1x1x250x16xbf16>
    %9 = vector.shape_cast %8 : vector<1x1x250x16xbf16> to vector<250x16xbf16>
    %cst_12 = arith.constant dense<0.000000e+00> : vector<20x16xf32>
    %10 = tpu.matmul %0, %9, %cst_12 {dimension_numbers = #tpu.dot_dimension_numbers<[1], [0], [0], [1], [0, 0, 1, 1], [], []>} : vector<20x250xbf16>, vector<250x16xbf16>, vector<20x16xf32> -> vector<20x16xf32>
    %11 = arith.maximumf %7, %10 : vector<20x16xf32>
    %c0_13 = arith.constant 0 : index
    %c3 = arith.constant 3 : index
    %c0_14 = arith.constant 0 : index
    %c0_15 = arith.constant 0 : index
    %12 = vector.load %arg1[%c0_13, %c3, %c0_14, %c0_15] : memref<1x4x250x16xbf16, #tpu.memory_space<vmem>>, vector<1x1x250x16xbf16>
    %13 = vector.shape_cast %12 : vector<1x1x250x16xbf16> to vector<250x16xbf16>
    %cst_16 = arith.constant dense<0.000000e+00> : vector<20x16xf32>
    %14 = tpu.matmul %0, %13, %cst_16 {dimension_numbers = #tpu.dot_dimension_numbers<[1], [0], [0], [1], [0, 0, 1, 1], [], []>} : vector<20x250xbf16>, vector<250x16xbf16>, vector<20x16xf32> -> vector<20x16xf32>
    %15 = arith.maximumf %11, %14 : vector<20x16xf32>
    %c0_17 = arith.constant 0 : index
    %c0_18 = arith.constant 0 : index
    %16 = vector.load %arg3[%c0_17, %c0_18] : memref<20x1xf32, #tpu.memory_space<vmem>>, vector<20x1xf32>
    %17 = vector.broadcast %16 : vector<20x1xf32> to vector<20x16xf32>
    %18 = arith.addf %15, %17 : vector<20x16xf32>
    %cst_19 = arith.constant 0.000000e+00 : f32
    %19 = vector.broadcast %cst_19 : f32 to vector<20x16xf32>
    %20 = arith.maximumf %18, %19 : vector<20x16xf32>
    %21 = arith.truncf %20 : vector<20x16xf32> to vector<20x16xbf16>
    %c0_20 = arith.constant 0 : index
    %c0_21 = arith.constant 0 : index
    %c0_22 = arith.constant 0 : index
    %22 = vector.load %arg4[%c0_20, %c0_21, %c0_22] : memref<1x20x16xbf16, #tpu.memory_space<vmem>>, vector<1x20x16xbf16>
    %23 = vector.shape_cast %22 : vector<1x20x16xbf16> to vector<20x16xbf16>
    %24 = vector.shape_cast %21 : vector<20x16xbf16> to vector<1x20x16xbf16>
    tpu.vector_store %arg4[%c0_20, %c0_21, %c0_22], %24 {strides = array<i32>} : memref<1x20x16xbf16, #tpu.memory_space<vmem>>, vector<1x20x16xbf16>,
    return
  }
  func.func @transform_0(%arg0: i32) -> (i32, i32, i32, i32) {
    %c0_i32 = arith.constant 0 : i32
    %c0_i32_0 = arith.constant 0 : i32
    %c0_i32_1 = arith.constant 0 : i32
    %c0_i32_2 = arith.constant 0 : i32
    return %arg0, %c0_i32, %c0_i32_0, %c0_i32_1 : i32, i32, i32, i32
  }
  func.func @transform_1(%arg0: i32) -> (i32, i32) {
    %c0_i32 = arith.constant 0 : i32
    %c0_i32_0 = arith.constant 0 : i32
    %c0_i32_1 = arith.constant 0 : i32
    return %c0_i32, %c0_i32_0 : i32, i32
  }
  func.func @transform_2(%arg0: i32) -> (i32, i32) {
    %c0_i32 = arith.constant 0 : i32
    %c0_i32_0 = arith.constant 0 : i32
    %c0_i32_1 = arith.constant 0 : i32
    return %c0_i32, %c0_i32_0 : i32, i32
  }
  func.func @transform_3(%arg0: i32) -> (i32, i32, i32) {
    %c0_i32 = arith.constant 0 : i32
    %c0_i32_0 = arith.constant 0 : i32
    %c0_i32_1 = arith.constant 0 : i32
    return %arg0, %c0_i32, %c0_i32_0 : i32, i32, i32
  }
}

module attributes {stable_mosaic.version = 11 : i64} {
  func.func @_fc_tail_kernel(%arg0: i32, %arg1: memref<2x320xbf16, #tpu.memory_space<vmem>>, %arg2: memref<320x50xbf16, #tpu.memory_space<vmem>>, %arg3: memref<1x50xf32, #tpu.memory_space<vmem>>, %arg4: memref<50x10xf32, #tpu.memory_space<vmem>>, %arg5: memref<1x10xf32, #tpu.memory_space<vmem>>, %arg6: memref<2x10xf32, #tpu.memory_space<vmem>>) attributes {dimension_semantics = [#tpu.dimension_semantics<parallel>], iteration_bounds = array<i64: 1>, scalar_prefetch = 0 : i64, scratch_operands = 0 : i64, tpu.core_type = #tpu.core_type<tc>, window_params = [{transform_indices = @transform_0, window_bounds = array<i64: 2, 320>}, {pipeline_mode = #tpu.pipeline_mode<synchronous>, transform_indices = @transform_1, window_bounds = array<i64: 320, 50>}, {pipeline_mode = #tpu.pipeline_mode<synchronous>, transform_indices = @transform_2, window_bounds = array<i64: 1, 50>}, {pipeline_mode = #tpu.pipeline_mode<synchronous>, transform_indices = @transform_3, window_bounds = array<i64: 50, 10>}, {pipeline_mode = #tpu.pipeline_mode<synchronous>, transform_indices = @transform_4, window_bounds = array<i64: 1, 10>}, {transform_indices = @transform_5, window_bounds = array<i64: 2, 10>}]} {
    %c0 = arith.constant 0 : index
    %c0_0 = arith.constant 0 : index
    %0 = vector.load %arg1[%c0, %c0_0] : memref<2x320xbf16, #tpu.memory_space<vmem>>, vector<2x320xbf16>
    %c0_1 = arith.constant 0 : index
    %c0_2 = arith.constant 0 : index
    %1 = vector.load %arg2[%c0_1, %c0_2] : memref<320x50xbf16, #tpu.memory_space<vmem>>, vector<320x50xbf16>
    %cst = arith.constant dense<0.000000e+00> : vector<2x50xf32>
    %2 = tpu.matmul %0, %1, %cst {dimension_numbers = #tpu.dot_dimension_numbers<[1], [0], [0], [1], [0, 0, 1, 1], [], []>} : vector<2x320xbf16>, vector<320x50xbf16>, vector<2x50xf32> -> vector<2x50xf32>
    %c0_3 = arith.constant 0 : index
    %c0_4 = arith.constant 0 : index
    %3 = vector.load %arg3[%c0_3, %c0_4] : memref<1x50xf32, #tpu.memory_space<vmem>>, vector<1x50xf32>
    %4 = vector.broadcast %3 : vector<1x50xf32> to vector<2x50xf32>
    %5 = arith.addf %2, %4 : vector<2x50xf32>
    %cst_5 = arith.constant 0.000000e+00 : f32
    %6 = vector.broadcast %cst_5 : f32 to vector<2x50xf32>
    %7 = arith.maximumf %5, %6 : vector<2x50xf32>
    %c0_6 = arith.constant 0 : index
    %c0_7 = arith.constant 0 : index
    %8 = vector.load %arg4[%c0_6, %c0_7] : memref<50x10xf32, #tpu.memory_space<vmem>>, vector<50x10xf32>
    %cst_8 = arith.constant dense<0.000000e+00> : vector<2x10xf32>
    %9 = tpu.matmul %7, %8, %cst_8 {dimension_numbers = #tpu.dot_dimension_numbers<[1], [0], [0], [1], [0, 0, 1, 1], [], []>} : vector<2x50xf32>, vector<50x10xf32>, vector<2x10xf32> -> vector<2x10xf32>
    %c0_9 = arith.constant 0 : index
    %c0_10 = arith.constant 0 : index
    %10 = vector.load %arg5[%c0_9, %c0_10] : memref<1x10xf32, #tpu.memory_space<vmem>>, vector<1x10xf32>
    %11 = vector.broadcast %10 : vector<1x10xf32> to vector<2x10xf32>
    %12 = arith.addf %9, %11 : vector<2x10xf32>
    %cst_11 = arith.constant dense<0xFF800000> : vector<2xf32>
    %13 = vector.multi_reduction <maximumf>, %12, %cst_11 [1] : vector<2x10xf32> to vector<2xf32>
    %14 = vector.shape_cast %13 : vector<2xf32> to vector<2x1xf32>
    %15 = vector.broadcast %14 : vector<2x1xf32> to vector<2x10xf32>
    %16 = arith.subf %12, %15 : vector<2x10xf32>
    %17 = math.exp %16 : vector<2x10xf32>
    %cst_12 = arith.constant dense<0.000000e+00> : vector<2xf32>
    %18 = vector.multi_reduction <add>, %17, %cst_12 [1] : vector<2x10xf32> to vector<2xf32>
    %19 = vector.shape_cast %18 : vector<2xf32> to vector<2x1xf32>
    %20 = math.log %19 : vector<2x1xf32>
    %21 = vector.broadcast %20 : vector<2x1xf32> to vector<2x10xf32>
    %22 = arith.subf %16, %21 : vector<2x10xf32>
    %c0_13 = arith.constant 0 : index
    %c0_14 = arith.constant 0 : index
    %23 = vector.load %arg6[%c0_13, %c0_14] : memref<2x10xf32, #tpu.memory_space<vmem>>, vector<2x10xf32>
    tpu.vector_store %arg6[%c0_13, %c0_14], %22 {strides = array<i32>} : memref<2x10xf32, #tpu.memory_space<vmem>>, vector<2x10xf32>,
    return
  }
  func.func @transform_0(%arg0: i32) -> (i32, i32) {
    %c0_i32 = arith.constant 0 : i32
    %c0_i32_0 = arith.constant 0 : i32
    return %arg0, %c0_i32 : i32, i32
  }
  func.func @transform_1(%arg0: i32) -> (i32, i32) {
    %c0_i32 = arith.constant 0 : i32
    %c0_i32_0 = arith.constant 0 : i32
    %c0_i32_1 = arith.constant 0 : i32
    return %c0_i32, %c0_i32_0 : i32, i32
  }
  func.func @transform_2(%arg0: i32) -> (i32, i32) {
    %c0_i32 = arith.constant 0 : i32
    %c0_i32_0 = arith.constant 0 : i32
    %c0_i32_1 = arith.constant 0 : i32
    return %c0_i32, %c0_i32_0 : i32, i32
  }
  func.func @transform_3(%arg0: i32) -> (i32, i32) {
    %c0_i32 = arith.constant 0 : i32
    %c0_i32_0 = arith.constant 0 : i32
    %c0_i32_1 = arith.constant 0 : i32
    return %c0_i32, %c0_i32_0 : i32, i32
  }
  func.func @transform_4(%arg0: i32) -> (i32, i32) {
    %c0_i32 = arith.constant 0 : i32
    %c0_i32_0 = arith.constant 0 : i32
    %c0_i32_1 = arith.constant 0 : i32
    return %c0_i32, %c0_i32_0 : i32, i32
  }
  func.func @transform_5(%arg0: i32) -> (i32, i32) {
    %c0_i32 = arith.constant 0 : i32
    %c0_i32_0 = arith.constant 0 : i32
    return %arg0, %c0_i32 : i32, i32
  }
}

</mosaic_0001>

<llo_original>
// kernel: net_forward.3
$region0: #{net_forward.3}
  #allocation0 [shape = 'u32[]', space=smem, size = 0x4, offset = 0x4, fixed_abs, tag = 'smem constant byte address 0x4 - core index']
  #allocation1 [shape = 'u32[144,128]{1,0:T(1,128)}', space=vmem, size = 0x12000, scoped, tag = 'internal scratch']
  %s0 = inlined_call_operand.vmem [shape: bf16[2,4,25,144], index: 0, kind: input, shape index: {}]
  %s1 = inlined_call_operand.vmem [shape: bf16[10,25], index: 1, kind: input, shape index: {}]
  %s2 = inlined_call_operand.vmem [shape: f32[10,1], index: 2, kind: input, shape index: {}]
  %s3 = inlined_call_operand.vmem [shape: bf16[2,10,144], index: 3, kind: output, shape index: {}]
  %s4 = sld [smem:[#allocation0]]
  $region45: #{net_forward.3} parent=0
    _
  %s6 = ssub.s32 1, %s4
  %s7 = scalar_select 0, %s6, %s4
  loop: start=0, step=1, limit=4
  $region2: #{net_forward.3} parent=0 // loop_pre_header
    _
  $region3: #{net_forward.3} parent=0 // loop_header
    %s9 = sphi 0, %s13
    %p10 = scmp.ge.s32.totalorder %s9, 4
    %s19 = sphi 0, %s21
    %s22 = sphi 0, %s19
    %s23 = sphi 0, %s22
    %s39 = sphi 0, %s23
    %s43 = sphi 0, %s43
    %s45 = sphi 0, %s43
    %s46 = sphi 0, %s45
    %s60 = sphi 0, %s46
    %s64 = sphi 0, %s64
    %s66 = sphi 0, %s64
    %s67 = sphi 0, %s66
    %s81 = sphi 0, %s67
    %s87 = sphi 0, %s89
    %s90 = sphi 0, %s87
    %s91 = sphi 0, %s90
    %s107 = sphi 0, %s91
  $region4: #{net_forward.3} parent=0 // loop_header_branch
    %12 = sbr.rel (%p10) target = $region8
  $region5: #{net_forward.3} parent=0 // loop_body
    %s14 = ssub.s32 %s9, 1
    %s15 = ssub.s32 %s9, 2
    %s16 = sadd.s32 %s9, 1
    %s17 = ssub.s32 %s9, %s16
    %p18 = scmp.eq.s32.totalorder %s17, 0
    %s20 = sadd.s32 %s19, 1
    %s21 = scalar_select %p18, %s19, %s20
    %p24 = pneg %p18
    %p25 = scmp.eq.s32.totalorder %s9, 1
    %p26 = por %p24, %p25
    %p27 = scmp.ne.s32.totalorder %s19, %s22
    %p28 = scmp.eq.s32.totalorder %s9, 0
    %p29 = por %p27, %p28
    %p30 = scmp.ne.s32.totalorder %s19, %s22
    %p31 = scmp.eq.s32.totalorder %s14, 1
    %p32 = por %p30, %p31
    %p33 = scmp.ne.s32.totalorder %s22, %s23
    %p34 = scmp.eq.s32.totalorder %s14, 0
    %p35 = por %p33, %p34
    %p36 = scmp.ne.s32.totalorder %s22, %s23
    %p37 = scmp.eq.s32.totalorder %s15, 1
    %p38 = por %p36, %p37
    %p40 = scmp.ne.s32.totalorder %s23, %s39
    %p41 = scmp.eq.s32.totalorder %s15, 0
    %p42 = por %p40, %p41
    %s44 = sadd.s32 %s43, 1
    %p47 = scmp.eq.s32.totalorder %s9, 1
    %p48 = scmp.ne.s32.totalorder %s43, %s45
    %p49 = scmp.eq.s32.totalorder %s9, 0
    %p50 = por %p48, %p49
    %p51 = scmp.ne.s32.totalorder %s43, %s45
    %p52 = scmp.eq.s32.totalorder %s14, 1
    %p53 = por %p51, %p52
    %p54 = scmp.ne.s32.totalorder %s45, %s46
    %p55 = scmp.eq.s32.totalorder %s14, 0
    %p56 = por %p54, %p55
    %p57 = scmp.ne.s32.totalorder %s45, %s46
    %p58 = scmp.eq.s32.totalorder %s15, 1
    %p59 = por %p57, %p58
    %p61 = scmp.ne.s32.totalorder %s46, %s60
    %p62 = scmp.eq.s32.totalorder %s15, 0
    %p63 = por %p61, %p62
    %s65 = sadd.s32 %s64, 1
    %p68 = scmp.eq.s32.totalorder %s9, 1
    %p69 = scmp.ne.s32.totalorder %s64, %s66
    %p70 = scmp.eq.s32.totalorder %s9, 0
    %p71 = por %p69, %p70
    %p72 = scmp.ne.s32.totalorder %s64, %s66
    %p73 = scmp.eq.s32.totalorder %s14, 1
    %p74 = por %p72, %p73
    %p75 = scmp.ne.s32.totalorder %s66, %s67
    %p76 = scmp.eq.s32.totalorder %s14, 0
    %p77 = por %p75, %p76
    %p78 = scmp.ne.s32.totalorder %s66, %s67
    %p79 = scmp.eq.s32.totalorder %s15, 1
    %p80 = por %p78, %p79
    %p82 = scmp.ne.s32.totalorder %s67, %s81
    %p83 = scmp.eq.s32.totalorder %s15, 0
    %p84 = por %p82, %p83
    %s85 = ssub.s32 %s9, %s16
    %p86 = scmp.eq.s32.totalorder %s85, 0
    %s88 = sadd.s32 %s87, 1
    %s89 = scalar_select %p86, %s87, %s88
    %p92 = pneg %p86
    %p93 = scmp.eq.s32.totalorder %s9, 1
    %p94 = por %p92, %p93
    %p95 = scmp.ne.s32.totalorder %s87, %s90
    %p96 = scmp.eq.s32.totalorder %s9, 0
    %p97 = por %p95, %p96
    %p98 = scmp.ne.s32.totalorder %s87, %s90
    %p99 = scmp.eq.s32.totalorder %s14, 1
    %p100 = por %p98, %p99
    %p101 = scmp.ne.s32.totalorder %s90, %s91
    %p102 = scmp.eq.s32.totalorder %s14, 0
    %p103 = por %p101, %p102
    %p104 = scmp.ne.s32.totalorder %s90, %s91
    %p105 = scmp.eq.s32.totalorder %s15, 1
    %p106 = por %p104, %p105
    %p108 = scmp.ne.s32.totalorder %s91, %s107
    %p109 = scmp.eq.s32.totalorder %s15, 0
    %p110 = por %p108, %p109
    %p111 = scmp.le.s32.totalorder 1, %s9
    %p112 = scmp.lt.s32.totalorder %s9, 3
    %p113 = pnand %p111, %p112
    %p114 = pneg %p113
    // Predicated region
    $region9: #{net_forward.3} parent=5 // pred_check
      _
    $region10: #{net_forward.3} parent=5 // pred_check_branch
      %116 = sbr.rel (%p113) target = $region12
    $region11: #{net_forward.3} parent=5 // pred_region
      %s117 = ssub.s32 %s9, 1
      // Predicated region
      $region13: #{net_forward.3} parent=11 // pred_check
        %p118 = pneg %p56
      $region14: #{net_forward.3} parent=11 // pred_check_branch
        %120 = sbr.rel (%p118) target = $region16
      $region15: #{net_forward.3} parent=11 // pred_region
        _
      $region16: #{net_forward.3} parent=11 // pred_fallthru
        _
      // Predicated region
      $region17: #{net_forward.3} parent=11 // pred_check
        %p121 = pneg %p77
      $region18: #{net_forward.3} parent=11 // pred_check_branch
        %123 = sbr.rel (%p121) target = $region20
      $region19: #{net_forward.3} parent=11 // pred_region
        _
      $region20: #{net_forward.3} parent=11 // pred_fallthru
        _
    $region12: #{net_forward.3} parent=5 // pred_fallthru
      _
    %p124 = scmp.lt.s32.totalorder %s9, 2
    // Predicated region
    $region21: #{net_forward.3} parent=5 // pred_check
      %p125 = pneg %p124
    $region22: #{net_forward.3} parent=5 // pred_check_branch
      %127 = sbr.rel (%p125) target = $region24
    $region23: #{net_forward.3} parent=5 // pred_region
      // Predicated region
      $region25: #{net_forward.3} parent=23 // pred_check
        %p128 = pneg %p29
      $region26: #{net_forward.3} parent=23 // pred_check_branch
        %130 = sbr.rel (%p128) target = $region28
      $region27: #{net_forward.3} parent=23 // pred_region
        %p131 = scmp.lt.s32.totalorder %s9, 1
        %s132 = scalar_select %p131, %s9, 1
        %s133 = smul.addr %s132, 32
        %s134 = smul.addr %s133, 4
        %s135 = scalar_lea.vmem %s0, %s134
      $region28: #{net_forward.3} parent=23 // pred_fallthru
        _
    $region24: #{net_forward.3} parent=5 // pred_fallthru
      _
    %p136 = scmp.le.s32.totalorder 1, %s9
    %p137 = scmp.lt.s32.totalorder %s9, 3
    %p138 = pnand %p136, %p137
    %p139 = pneg %p138
    // Predicated region
    $region29: #{net_forward.3} parent=5 // pred_check
      _
    $region30: #{net_forward.3} parent=5 // pred_check_branch
      %141 = sbr.rel (%p138) target = $region32
    $region31: #{net_forward.3} parent=5 // pred_region
      %s142 = ssub.s32 %s9, 1
      %p143 = scmp.lt.s32.totalorder %s14, 1
      %s144 = scalar_select %p143, %s14, 1
      %s145 = smul.addr %s144, 32
      %s146 = smul.addr %s145, 4
      %s147 = scalar_lea.vmem %s0, %s146
      %p148 = pneg %p35
      %p149 = pneg %p32
      %p150 = pneg %p56
      %p151 = pneg %p53
      %p152 = pneg %p77
      %p153 = pneg %p74
      %p154 = pneg %p103
      %p155 = pneg %p100
      %p156 = scmp.lt.s32.totalorder %s14, 1
      %s157 = scalar_select %p156, %s14, 1
      %s158 = smul.addr %s157, 4
      %s159 = smul.addr %s158, 4
      %s160 = scalar_lea.vmem %s3, %s159
      %p161 = scmp.lt.s32.totalorder %s14, 1
      %s162 = scalar_select %p161, %s14, 1
      %s163 = smul.addr %s162, 32
      %s164 = smul.addr %s163, 4
      %s165 = scalar_lea.vmem %s0, %s164
      %p166 = scmp.lt.s32.totalorder %s14, 1
      %s167 = scalar_select %p166, %s14, 1
      %s168 = smul.addr %s167, 4
      %s169 = smul.addr %s168, 4
      %s170 = scalar_lea.vmem %s3, %s169
      %v172 = vld [vmem:[%s1] sm:$0xf]
      %v173 = vld [vmem:[%s1 + $0x4] sm:$0x1]
      %v174 = vld [vmem:[%s165] sm:$0xff]
      %v175 = vld [vmem:[%s165 + $0x8] sm:$0xff]
      %v176 = vld [vmem:[%s165 + $0x10] sm:$0xff]
      %v177 = vld [vmem:[%s165 + $0x18] sm:$0x11]
      %v180 = vunpack.c.l.b16 %v172
      %v181 = vunpack.c.l.b16 %v173
      %v182 = vpack.c.b16 %v181, %v180
      %v187 = vunpack.c.l.b16 %v174
      %v188 = vunpack.c.h.b16 %v174
      %v189 = vunpack.c.l.b16 %v175
      %v190 = vunpack.c.h.b16 %v175
      %v191 = vunpack.c.l.b16 %v176
      %v192 = vunpack.c.h.b16 %v176
      %v193 = vunpack.c.l.b16 %v177
      %v194 = vunpack.c.h.b16 %v177
      %v195 = vpack.c.b16 %v189, %v187
      %v196 = vpack.c.b16 %v190, %v188
      %v197 = vpack.c.b16 %v193, %v191
      %v198 = vpack.c.b16 %v194, %v192
      %vm201 = vcmask 203776
      %v203 = vsel %vm201, %v182, 0
      %vm205 = vcmask 1043456
      %vm206 = vcmask 1044480
      %v207 = vsel %vm205, 4294967295, 65535
      %v208 = vsel %vm206, %v207, 0
      %v210 = vand.u32 %v197, %v208
      %v213 = vand.u32 %v198, %v208
      %215 = vmatprep.subr.bf16.mxu0 %v196
      %216 = vmatpush1.bf16.msra.mxu0 %v195
      %217 = vmatprep.subr.bf16.mxu0 %v213
      %218 = vmatpush1.bf16.msra.mxu0 %v210
      %219 = vmatprep.subr.bf16.mxu0 0
      %220 = vmatpush1.bf16.msra.mxu0 0
      %221 = vmatprep.subr.bf16.mxu0 0
      %222 = vmatpush1.bf16.msra.mxu0 0
      %223 = vmatprep.subr.bf16.mxu0 0
      %224 = vmatpush1.bf16.msra.mxu0 0
      %225 = vmatprep.subr.bf16.mxu0 0
      %226 = vmatpush1.bf16.msra.mxu0 0
      %227 = vmatprep.subr.bf16.mxu0 0
      %228 = vmatpush1.bf16.msra.mxu0 0
      %229 = vmatprep.subr.bf16.mxu0 0
      %230 = vmatpush1.bf16.msra.mxu0 0
      %231 = vmatprep.subr.bf16.mxu0 0
      %232 = vmatpush1.bf16.msra.mxu0 0
      %233 = vmatprep.subr.bf16.mxu0 0
      %234 = vmatpush1.bf16.msra.mxu0 0
      %235 = vmatprep.subr.bf16.mxu0 0
      %236 = vmatpush1.bf16.msra.mxu0 0
      %237 = vmatprep.subr.bf16.mxu0 0
      %238 = vmatpush1.bf16.msra.mxu0 0
      %239 = vmatprep.subr.bf16.mxu0 0
      %240 = vmatpush1.bf16.msra.mxu0 0
      %241 = vmatprep.subr.bf16.mxu0 0
      %242 = vmatpush1.bf16.msra.mxu0 0
      %243 = vmatprep.subr.bf16.mxu0 0
      %244 = vmatpush1.bf16.msra.mxu0 0
      %245 = vmatprep.subr.bf16.mxu0 0
      %246 = vmatpush1.bf16.msra.mxu0 0
      %247 = vmatprep.mubr.bf16.mxu0 0
      %248 = vmatmul.mubr.bf16.gmra.mrb[0].mxu0 %v203
      %v249 = vpop.f32.mrb[0].mxu0
      %v250 = vadd.f32 0.0, %v249
      %v251 = vpop.f32.mrb[0].mxu0
      %v252 = vadd.f32 0.0, %v251
      %v253 = vpop.f32.mrb[0].mxu0
      %v254 = vadd.f32 0.0, %v253
      %v255 = vpop.f32.mrb[0].mxu0
      %v256 = vadd.f32 0.0, %v255
      %257 = vdwg.mxu0
      %s258 = scalar_lea.vmem %s165, 32
      %v259 = vld [vmem:[%s258] sm:$0xff]
      %v260 = vld [vmem:[%s258 + $0x8] sm:$0xff]
      %v261 = vld [vmem:[%s258 + $0x10] sm:$0xff]
      %v262 = vld [vmem:[%s258 + $0x18] sm:$0x11]
      %v267 = vunpack.c.l.b16 %v259
      %v268 = vunpack.c.h.b16 %v259
      %v269 = vunpack.c.l.b16 %v260
      %v270 = vunpack.c.h.b16 %v260
      %v271 = vunpack.c.l.b16 %v261
      %v272 = vunpack.c.h.b16 %v261
      %v273 = vunpack.c.l.b16 %v262
      %v274 = vunpack.c.h.b16 %v262
      %v275 = vpack.c.b16 %v269, %v267
      %v276 = vpack.c.b16 %v270, %v268
      %v277 = vpack.c.b16 %v273, %v271
      %v278 = vpack.c.b16 %v274, %v272
      %v282 = vand.u32 %v277, %v208
      %v285 = vand.u32 %v278, %v208
      %287 = vmatprep.subr.bf16.mxu0 %v276
      %288 = vmatpush1.bf16.msra.mxu0 %v275
      %289 = vmatprep.subr.bf16.mxu0 %v285
      %290 = vmatpush1.bf16.msra.mxu0 %v282
      %291 = vmatprep.subr.bf16.mxu0 0
      %292 = vmatpush1.bf16.msra.mxu0 0
      %293 = vmatprep.subr.bf16.mxu0 0
      %294 = vmatpush1.bf16.msra.mxu0 0
      %295 = vmatprep.subr.bf16.mxu0 0
      %296 = vmatpush1.bf16.msra.mxu0 0
      %297 = vmatprep.subr.bf16.mxu0 0
      %298 = vmatpush1.bf16.msra.mxu0 0
      %299 = vmatprep.subr.bf16.mxu0 0
      %300 = vmatpush1.bf16.msra.mxu0 0
      %301 = vmatprep.subr.bf16.mxu0 0
      %302 = vmatpush1.bf16.msra.mxu0 0
      %303 = vmatprep.subr.bf16.mxu0 0
      %304 = vmatpush1.bf16.msra.mxu0 0
      %305 = vmatprep.subr.bf16.mxu0 0
      %306 = vmatpush1.bf16.msra.mxu0 0
      %307 = vmatprep.subr.bf16.mxu0 0
      %308 = vmatpush1.bf16.msra.mxu0 0
      %309 = vmatprep.subr.bf16.mxu0 0
      %310 = vmatpush1.bf16.msra.mxu0 0
      %311 = vmatprep.subr.bf16.mxu0 0
      %312 = vmatpush1.bf16.msra.mxu0 0
      %313 = vmatprep.subr.bf16.mxu0 0
      %314 = vmatpush1.bf16.msra.mxu0 0
      %315 = vmatprep.subr.bf16.mxu0 0
      %316 = vmatpush1.bf16.msra.mxu0 0
      %317 = vmatprep.subr.bf16.mxu0 0
      %318 = vmatpush1.bf16.msra.mxu0 0
      %319 = vmatprep.mubr.bf16.mxu0 0
      %320 = vmatmul.mubr.bf16.gmra.mrb[0].mxu0 %v203
      %v321 = vpop.f32.mrb[0].mxu0
      %v322 = vadd.f32 0.0, %v321
      %v323 = vpop.f32.mrb[0].mxu0
      %v324 = vadd.f32 0.0, %v323
      %v325 = vpop.f32.mrb[0].mxu0
      %v326 = vadd.f32 0.0, %v325
      %v327 = vpop.f32.mrb[0].mxu0
      %v328 = vadd.f32 0.0, %v327
      %329 = vdwg.mxu0
      %v330 = vmax.f32 %v250, %v322
      %v331 = vmax.f32 %v252, %v324
      %v332 = vmax.f32 %v254, %v326
      %v333 = vmax.f32 %v256, %v328
      %s334 = scalar_lea.vmem %s165, 64
      %v335 = vld [vmem:[%s334] sm:$0xff]
      %v336 = vld [vmem:[%s334 + $0x8] sm:$0xff]
      %v337 = vld [vmem:[%s334 + $0x10] sm:$0xff]
      %v338 = vld [vmem:[%s334 + $0x18] sm:$0x11]
      %v343 = vunpack.c.l.b16 %v335
      %v344 = vunpack.c.h.b16 %v335
      %v345 = vunpack.c.l.b16 %v336
      %v346 = vunpack.c.h.b16 %v336
      %v347 = vunpack.c.l.b16 %v337
      %v348 = vunpack.c.h.b16 %v337
      %v349 = vunpack.c.l.b16 %v338
      %v350 = vunpack.c.h.b16 %v338
      %v351 = vpack.c.b16 %v345, %v343
      %v352 = vpack.c.b16 %v346, %v344
      %v353 = vpack.c.b16 %v349, %v347
      %v354 = vpack.c.b16 %v350, %v348
      %v358 = vand.u32 %v353, %v208
      %v361 = vand.u32 %v354, %v208
      %363 = vmatprep.subr.bf16.mxu0 %v352
      %364 = vmatpush1.bf16.msra.mxu0 %v351
      %365 = vmatprep.subr.bf16.mxu0 %v361
      %366 = vmatpush1.bf16.msra.mxu0 %v358
      %367 = vmatprep.subr.bf16.mxu0 0
      %368 = vmatpush1.bf16.msra.mxu0 0
      %369 = vmatprep.subr.bf16.mxu0 0
      %370 = vmatpush1.bf16.msra.mxu0 0
      %371 = vmatprep.subr.bf16.mxu0 0
      %372 = vmatpush1.bf16.msra.mxu0 0
      %373 = vmatprep.subr.bf16.mxu0 0
      %374 = vmatpush1.bf16.msra.mxu0 0
      %375 = vmatprep.subr.bf16.mxu0 0
      %376 = vmatpush1.bf16.msra.mxu0 0
      %377 = vmatprep.subr.bf16.mxu0 0
      %378 = vmatpush1.bf16.msra.mxu0 0
      %379 = vmatprep.subr.bf16.mxu0 0
      %380 = vmatpush1.bf16.msra.mxu0 0
      %381 = vmatprep.subr.bf16.mxu0 0
      %382 = vmatpush1.bf16.msra.mxu0 0
      %383 = vmatprep.subr.bf16.mxu0 0
      %384 = vmatpush1.bf16.msra.mxu0 0
      %385 = vmatprep.subr.bf16.mxu0 0
      %386 = vmatpush1.bf16.msra.mxu0 0
      %387 = vmatprep.subr.bf16.mxu0 0
      %388 = vmatpush1.bf16.msra.mxu0 0
      %389 = vmatprep.subr.bf16.mxu0 0
      %390 = vmatpush1.bf16.msra.mxu0 0
      %391 = vmatprep.subr.bf16.mxu0 0
      %392 = vmatpush1.bf16.msra.mxu0 0
      %393 = vmatprep.subr.bf16.mxu0 0
      %394 = vmatpush1.bf16.msra.mxu0 0
      %395 = vmatprep.mubr.bf16.mxu0 0
      %396 = vmatmul.mubr.bf16.gmra.mrb[0].mxu0 %v203
      %v397 = vpop.f32.mrb[0].mxu0
      %v398 = vadd.f32 0.0, %v397
      %v399 = vpop.f32.mrb[0].mxu0
      %v400 = vadd.f32 0.0, %v399
      %v401 = vpop.f32.mrb[0].mxu0
      %v402 = vadd.f32 0.0, %v401
      %v403 = vpop.f32.mrb[0].mxu0
      %v404 = vadd.f32 0.0, %v403
      %405 = vdwg.mxu0
      %v406 = vmax.f32 %v330, %v398
      %v407 = vmax.f32 %v331, %v400
      %v408 = vmax.f32 %v332, %v402
      %v409 = vmax.f32 %v333, %v404
      %s410 = scalar_lea.vmem %s165, 96
      %v411 = vld [vmem:[%s410] sm:$0xff]
      %v412 = vld [vmem:[%s410 + $0x8] sm:$0xff]
      %v413 = vld [vmem:[%s410 + $0x10] sm:$0xff]
      %v414 = vld [vmem:[%s410 + $0x18] sm:$0x11]
      %v419 = vunpack.c.l.b16 %v411
      %v420 = vunpack.c.h.b16 %v411
      %v421 = vunpack.c.l.b16 %v412
      %v422 = vunpack.c.h.b16 %v412
      %v423 = vunpack.c.l.b16 %v413
      %v424 = vunpack.c.h.b16 %v413
      %v425 = vunpack.c.l.b16 %v414
      %v426 = vunpack.c.h.b16 %v414
      %v427 = vpack.c.b16 %v421, %v419
      %v428 = vpack.c.b16 %v422, %v420
      %v429 = vpack.c.b16 %v425, %v423
      %v430 = vpack.c.b16 %v426, %v424
      %v434 = vand.u32 %v429, %v208
      %v437 = vand.u32 %v430, %v208
      %439 = vmatprep.subr.bf16.mxu0 %v428
      %440 = vmatpush1.bf16.msra.mxu0 %v427
      %441 = vmatprep.subr.bf16.mxu0 %v437
      %442 = vmatpush1.bf16.msra.mxu0 %v434
      %443 = vmatprep.subr.bf16.mxu0 0
      %444 = vmatpush1.bf16.msra.mxu0 0
      %445 = vmatprep.subr.bf16.mxu0 0
      %446 = vmatpush1.bf16.msra.mxu0 0
      %447 = vmatprep.subr.bf16.mxu0 0
      %448 = vmatpush1.bf16.msra.mxu0 0
      %449 = vmatprep.subr.bf16.mxu0 0
      %450 = vmatpush1.bf16.msra.mxu0 0
      %451 = vmatprep.subr.bf16.mxu0 0
      %452 = vmatpush1.bf16.msra.mxu0 0
      %453 = vmatprep.subr.bf16.mxu0 0
      %454 = vmatpush1.bf16.msra.mxu0 0
      %455 = vmatprep.subr.bf16.mxu0 0
      %456 = vmatpush1.bf16.msra.mxu0 0
      %457 = vmatprep.subr.bf16.mxu0 0
      %458 = vmatpush1.bf16.msra.mxu0 0
      %459 = vmatprep.subr.bf16.mxu0 0
      %460 = vmatpush1.bf16.msra.mxu0 0
      %461 = vmatprep.subr.bf16.mxu0 0
      %462 = vmatpush1.bf16.msra.mxu0 0
      %463 = vmatprep.subr.bf16.mxu0 0
      %464 = vmatpush1.bf16.msra.mxu0 0
      %465 = vmatprep.subr.bf16.mxu0 0
      %466 = vmatpush1.bf16.msra.mxu0 0
      %467 = vmatprep.subr.bf16.mxu0 0
      %468 = vmatpush1.bf16.msra.mxu0 0
      %469 = vmatprep.subr.bf16.mxu0 0
      %470 = vmatpush1.bf16.msra.mxu0 0
      %471 = vmatprep.mubr.bf16.mxu0 0
      %472 = vmatmul.mubr.bf16.gmra.mrb[0].mxu0 %v203
      %v473 = vpop.f32.mrb[0].mxu0
      %v474 = vadd.f32 0.0, %v473
      %v475 = vpop.f32.mrb[0].mxu0
      %v476 = vadd.f32 0.0, %v475
      %v477 = vpop.f32.mrb[0].mxu0
      %v478 = vadd.f32 0.0, %v477
      %v479 = vpop.f32.mrb[0].mxu0
      %v480 = vadd.f32 0.0, %v479
      %481 = vdwg.mxu0
      %v482 = vmax.f32 %v406, %v474
      %v483 = vmax.f32 %v407, %v476
      %v484 = vmax.f32 %v408, %v478
      %v485 = vmax.f32 %v409, %v480
      %v486 = vld [vmem:[%s2] sm:$0xff]
      %v487 = vld [vmem:[%s2 + $0x8] sm:$0x3]
      %489 = vset.pattern.permute.xlu0 0
      %490 = vperm.xlu0 %489, %v486
      %v491 = vpop.permute.xlu0 %490
      %494 = vset.pattern.permute.xlu0 0
      %495 = vperm.xlu0 %494, %v487
      %v496 = vpop.permute.xlu0 %495
      %v498 = vadd.f32 %v482, %v491
      %v499 = vadd.f32 %v483, %v491
      %v500 = vadd.f32 %v484, %v496
      %v501 = vadd.f32 %v485, %v496
      %v502 = vmax.f32 %v498, 0.0
      %v503 = vmax.f32 %v499, 0.0
      %v504 = vmax.f32 %v500, 0.0
      %v505 = vmax.f32 %v501, 0.0
      %v506 = vpack.c.bf16 %v504, %v502
      %v507 = vpack.c.bf16 %v505, %v503
      %v510 = vunpack.c.l.b16 %v506
      %v511 = vunpack.c.l.b16 %v507
      %v512 = vunpack.c.h.b16 %v506
      %v513 = vunpack.c.h.b16 %v507
      %v514 = vpack.c.b16 %v511, %v510
      %v515 = vpack.c.b16 %v513, %v512
      %vm518 = vcmask 130052
      %vm519 = vmor %vm518, %vm205
      %520 = vst.msk [vmem:[%s170] sm:$0xff] %vm519, %v514
      %vm521 = vcmask 1040384
      %vm522 = vcmask 126980
      %vm523 = vmor %vm522, %vm521
      %524 = vst.msk [vmem:[%s170 + $0x8] sm:$0x11] %vm523, %v515
      %p525 = scmp.lt.s32.totalorder %s14, 1
      %s526 = scalar_select %p525, %s14, 1
      %s527 = smul.addr %s526, 4
      %s528 = smul.addr %s527, 4
      %s529 = scalar_lea.vmem %s3, %s528
      // Predicated region
      $region33: #{net_forward.3} parent=31 // pred_check
        %p530 = pneg %p100
      $region34: #{net_forward.3} parent=31 // pred_check_branch
        %532 = sbr.rel (%p530) target = $region36
      $region35: #{net_forward.3} parent=31 // pred_region
        _
      $region36: #{net_forward.3} parent=31 // pred_fallthru
        _
    $region32: #{net_forward.3} parent=5 // pred_fallthru
      _
    %p533 = scmp.le.s32.totalorder 2, %s9
    // Predicated region
    $region37: #{net_forward.3} parent=5 // pred_check
      %p534 = pneg %p533
    $region38: #{net_forward.3} parent=5 // pred_check_branch
      %536 = sbr.rel (%p534) target = $region40
    $region39: #{net_forward.3} parent=5 // pred_region
      %s537 = ssub.s32 %s9, 2
      // Predicated region
      $region41: #{net_forward.3} parent=39 // pred_check
        %p538 = pneg %p106
      $region42: #{net_forward.3} parent=39 // pred_check_branch
        %540 = sbr.rel (%p538) target = $region44
      $region43: #{net_forward.3} parent=39 // pred_region
        %p541 = scmp.lt.s32.totalorder %s15, 1
        %s542 = scalar_select %p541, %s15, 1
        %s543 = smul.addr %s542, 4
        %s544 = smul.addr %s543, 4
        %s545 = scalar_lea.vmem %s3, %s544
      $region44: #{net_forward.3} parent=39 // pred_fallthru
        _
    $region40: #{net_forward.3} parent=5 // pred_fallthru
      _
  $region6: #{net_forward.3} parent=0 // loop_footer
    %s13 = sadd.s32 1, %s9
  $region7: #{net_forward.3} parent=0 // loop_footer_branch
    %8 = sbr.rel target = $region3
  $region8: #{net_forward.3} parent=0 // loop_exit
    _

// kernel: net_forward.4
$region0: #{net_forward.4}
  #allocation0 [shape = 'u32[]', space=smem, size = 0x4, offset = 0x4, fixed_abs, tag = 'smem constant byte address 0x4 - core index']
  #allocation1 [shape = 'u32[144,128]{1,0:T(1,128)}', space=vmem, size = 0x12000, scoped, tag = 'internal scratch']
  %s0 = inlined_call_operand.vmem [shape: bf16[2,4,250,16], index: 0, kind: input, shape index: {}]
  %s1 = inlined_call_operand.vmem [shape: bf16[20,250], index: 1, kind: input, shape index: {}]
  %s2 = inlined_call_operand.vmem [shape: f32[20,1], index: 2, kind: input, shape index: {}]
  %s3 = inlined_call_operand.vmem [shape: bf16[2,20,16], index: 3, kind: output, shape index: {}]
  %s4 = sld [smem:[#allocation0]]
  $region45: #{net_forward.4} parent=0
    _
  %s6 = ssub.s32 1, %s4
  %s7 = scalar_select 0, %s6, %s4
  loop: start=0, step=1, limit=4
  $region2: #{net_forward.4} parent=0 // loop_pre_header
    _
  $region3: #{net_forward.4} parent=0 // loop_header
    %s9 = sphi 0, %s13
    %p10 = scmp.ge.s32.totalorder %s9, 4
    %s19 = sphi 0, %s21
    %s22 = sphi 0, %s19
    %s23 = sphi 0, %s22
    %s39 = sphi 0, %s23
    %s43 = sphi 0, %s43
    %s45 = sphi 0, %s43
    %s46 = sphi 0, %s45
    %s60 = sphi 0, %s46
    %s64 = sphi 0, %s64
    %s66 = sphi 0, %s64
    %s67 = sphi 0, %s66
    %s81 = sphi 0, %s67
    %s87 = sphi 0, %s89
    %s90 = sphi 0, %s87
    %s91 = sphi 0, %s90
    %s107 = sphi 0, %s91
  $region4: #{net_forward.4} parent=0 // loop_header_branch
    %12 = sbr.rel (%p10) target = $region8
  $region5: #{net_forward.4} parent=0 // loop_body
    %s14 = ssub.s32 %s9, 1
    %s15 = ssub.s32 %s9, 2
    %s16 = sadd.s32 %s9, 1
    %s17 = ssub.s32 %s9, %s16
    %p18 = scmp.eq.s32.totalorder %s17, 0
    %s20 = sadd.s32 %s19, 1
    %s21 = scalar_select %p18, %s19, %s20
    %p24 = pneg %p18
    %p25 = scmp.eq.s32.totalorder %s9, 1
    %p26 = por %p24, %p25
    %p27 = scmp.ne.s32.totalorder %s19, %s22
    %p28 = scmp.eq.s32.totalorder %s9, 0
    %p29 = por %p27, %p28
    %p30 = scmp.ne.s32.totalorder %s19, %s22
    %p31 = scmp.eq.s32.totalorder %s14, 1
    %p32 = por %p30, %p31
    %p33 = scmp.ne.s32.totalorder %s22, %s23
    %p34 = scmp.eq.s32.totalorder %s14, 0
    %p35 = por %p33, %p34
    %p36 = scmp.ne.s32.totalorder %s22, %s23
    %p37 = scmp.eq.s32.totalorder %s15, 1
    %p38 = por %p36, %p37
    %p40 = scmp.ne.s32.totalorder %s23, %s39
    %p41 = scmp.eq.s32.totalorder %s15, 0
    %p42 = por %p40, %p41
    %s44 = sadd.s32 %s43, 1
    %p47 = scmp.eq.s32.totalorder %s9, 1
    %p48 = scmp.ne.s32.totalorder %s43, %s45
    %p49 = scmp.eq.s32.totalorder %s9, 0
    %p50 = por %p48, %p49
    %p51 = scmp.ne.s32.totalorder %s43, %s45
    %p52 = scmp.eq.s32.totalorder %s14, 1
    %p53 = por %p51, %p52
    %p54 = scmp.ne.s32.totalorder %s45, %s46
    %p55 = scmp.eq.s32.totalorder %s14, 0
    %p56 = por %p54, %p55
    %p57 = scmp.ne.s32.totalorder %s45, %s46
    %p58 = scmp.eq.s32.totalorder %s15, 1
    %p59 = por %p57, %p58
    %p61 = scmp.ne.s32.totalorder %s46, %s60
    %p62 = scmp.eq.s32.totalorder %s15, 0
    %p63 = por %p61, %p62
    %s65 = sadd.s32 %s64, 1
    %p68 = scmp.eq.s32.totalorder %s9, 1
    %p69 = scmp.ne.s32.totalorder %s64, %s66
    %p70 = scmp.eq.s32.totalorder %s9, 0
    %p71 = por %p69, %p70
    %p72 = scmp.ne.s32.totalorder %s64, %s66
    %p73 = scmp.eq.s32.totalorder %s14, 1
    %p74 = por %p72, %p73
    %p75 = scmp.ne.s32.totalorder %s66, %s67
    %p76 = scmp.eq.s32.totalorder %s14, 0
    %p77 = por %p75, %p76
    %p78 = scmp.ne.s32.totalorder %s66, %s67
    %p79 = scmp.eq.s32.totalorder %s15, 1
    %p80 = por %p78, %p79
    %p82 = scmp.ne.s32.totalorder %s67, %s81
    %p83 = scmp.eq.s32.totalorder %s15, 0
    %p84 = por %p82, %p83
    %s85 = ssub.s32 %s9, %s16
    %p86 = scmp.eq.s32.totalorder %s85, 0
    %s88 = sadd.s32 %s87, 1
    %s89 = scalar_select %p86, %s87, %s88
    %p92 = pneg %p86
    %p93 = scmp.eq.s32.totalorder %s9, 1
    %p94 = por %p92, %p93
    %p95 = scmp.ne.s32.totalorder %s87, %s90
    %p96 = scmp.eq.s32.totalorder %s9, 0
    %p97 = por %p95, %p96
    %p98 = scmp.ne.s32.totalorder %s87, %s90
    %p99 = scmp.eq.s32.totalorder %s14, 1
    %p100 = por %p98, %p99
    %p101 = scmp.ne.s32.totalorder %s90, %s91
    %p102 = scmp.eq.s32.totalorder %s14, 0
    %p103 = por %p101, %p102
    %p104 = scmp.ne.s32.totalorder %s90, %s91
    %p105 = scmp.eq.s32.totalorder %s15, 1
    %p106 = por %p104, %p105
    %p108 = scmp.ne.s32.totalorder %s91, %s107
    %p109 = scmp.eq.s32.totalorder %s15, 0
    %p110 = por %p108, %p109
    %p111 = scmp.le.s32.totalorder 1, %s9
    %p112 = scmp.lt.s32.totalorder %s9, 3
    %p113 = pnand %p111, %p112
    %p114 = pneg %p113
    // Predicated region
    $region9: #{net_forward.4} parent=5 // pred_check
      _
    $region10: #{net_forward.4} parent=5 // pred_check_branch
      %116 = sbr.rel (%p113) target = $region12
    $region11: #{net_forward.4} parent=5 // pred_region
      %s117 = ssub.s32 %s9, 1
      // Predicated region
      $region13: #{net_forward.4} parent=11 // pred_check
        %p118 = pneg %p56
      $region14: #{net_forward.4} parent=11 // pred_check_branch
        %120 = sbr.rel (%p118) target = $region16
      $region15: #{net_forward.4} parent=11 // pred_region
        _
      $region16: #{net_forward.4} parent=11 // pred_fallthru
        _
      // Predicated region
      $region17: #{net_forward.4} parent=11 // pred_check
        %p121 = pneg %p77
      $region18: #{net_forward.4} parent=11 // pred_check_branch
        %123 = sbr.rel (%p121) target = $region20
      $region19: #{net_forward.4} parent=11 // pred_region
        _
      $region20: #{net_forward.4} parent=11 // pred_fallthru
        _
    $region12: #{net_forward.4} parent=5 // pred_fallthru
      _
    %p124 = scmp.lt.s32.totalorder %s9, 2
    // Predicated region
    $region21: #{net_forward.4} parent=5 // pred_check
      %p125 = pneg %p124
    $region22: #{net_forward.4} parent=5 // pred_check_branch
      %127 = sbr.rel (%p125) target = $region24
    $region23: #{net_forward.4} parent=5 // pred_region
      // Predicated region
      $region25: #{net_forward.4} parent=23 // pred_check
        %p128 = pneg %p29
      $region26: #{net_forward.4} parent=23 // pred_check_branch
        %130 = sbr.rel (%p128) target = $region28
      $region27: #{net_forward.4} parent=23 // pred_region
        %p131 = scmp.lt.s32.totalorder %s9, 1
        %s132 = scalar_select %p131, %s9, 1
        %s133 = smul.addr %s132, 128
        %s134 = smul.addr %s133, 4
        %s135 = scalar_lea.vmem %s0, %s134
      $region28: #{net_forward.4} parent=23 // pred_fallthru
        _
    $region24: #{net_forward.4} parent=5 // pred_fallthru
      _
    %p136 = scmp.le.s32.totalorder 1, %s9
    %p137 = scmp.lt.s32.totalorder %s9, 3
    %p138 = pnand %p136, %p137
    %p139 = pneg %p138
    // Predicated region
    $region29: #{net_forward.4} parent=5 // pred_check
      _
    $region30: #{net_forward.4} parent=5 // pred_check_branch
      %141 = sbr.rel (%p138) target = $region32
    $region31: #{net_forward.4} parent=5 // pred_region
      %s142 = ssub.s32 %s9, 1
      %p143 = scmp.lt.s32.totalorder %s14, 1
      %s144 = scalar_select %p143, %s14, 1
      %s145 = smul.addr %s144, 128
      %s146 = smul.addr %s145, 4
      %s147 = scalar_lea.vmem %s0, %s146
      %p148 = pneg %p35
      %p149 = pneg %p32
      %p150 = pneg %p56
      %p151 = pneg %p53
      %p152 = pneg %p77
      %p153 = pneg %p74
      %p154 = pneg %p103
      %p155 = pneg %p100
      %p156 = scmp.lt.s32.totalorder %s14, 1
      %s157 = scalar_select %p156, %s14, 1
      %s158 = smul.addr %s157, 3
      %s159 = smul.addr %s158, 4
      %s160 = scalar_lea.vmem %s3, %s159
      %p161 = scmp.lt.s32.totalorder %s14, 1
      %s162 = scalar_select %p161, %s14, 1
      %s163 = smul.addr %s162, 128
      %s164 = smul.addr %s163, 4
      %s165 = scalar_lea.vmem %s0, %s164
      %p166 = scmp.lt.s32.totalorder %s14, 1
      %s167 = scalar_select %p166, %s14, 1
      %s168 = smul.addr %s167, 3
      %s169 = smul.addr %s168, 4
      %s170 = scalar_lea.vmem %s3, %s169
      %v172 = vld [vmem:[%s1] sm:$0xff]
      %v173 = vld [vmem:[%s1 + $0x8] sm:$0xff]
      %v174 = vld [vmem:[%s1 + $0x10] sm:$0x33]
      %v175 = vld [vmem:[%s165] sm:$0xf]
      %v176 = vld [vmem:[%s165 + $0x4] sm:$0xf]
      %v177 = vld [vmem:[%s165 + $0x8] sm:$0xf]
      %v178 = vld [vmem:[%s165 + $0xc] sm:$0xf]
      %v179 = vld [vmem:[%s165 + $0x10] sm:$0xf]
      %v180 = vld [vmem:[%s165 + $0x14] sm:$0xf]
      %v181 = vld [vmem:[%s165 + $0x18] sm:$0xf]
      %v182 = vld [vmem:[%s165 + $0x1c] sm:$0xf]
      %v183 = vld [vmem:[%s165 + $0x20] sm:$0xf]
      %v184 = vld [vmem:[%s165 + $0x24] sm:$0xf]
      %v185 = vld [vmem:[%s165 + $0x28] sm:$0xf]
      %v186 = vld [vmem:[%s165 + $0x2c] sm:$0xf]
      %v187 = vld [vmem:[%s165 + $0x30] sm:$0xf]
      %v188 = vld [vmem:[%s165 + $0x34] sm:$0xf]
      %v189 = vld [vmem:[%s165 + $0x38] sm:$0xf]
      %v190 = vld [vmem:[%s165 + $0x3c] sm:$0xf]
      %v191 = vld [vmem:[%s165 + $0x40] sm:$0xf]
      %v192 = vld [vmem:[%s165 + $0x44] sm:$0xf]
      %v193 = vld [vmem:[%s165 + $0x48] sm:$0xf]
      %v194 = vld [vmem:[%s165 + $0x4c] sm:$0xf]
      %v195 = vld [vmem:[%s165 + $0x50] sm:$0xf]
      %v196 = vld [vmem:[%s165 + $0x54] sm:$0xf]
      %v197 = vld [vmem:[%s165 + $0x58] sm:$0xf]
      %v198 = vld [vmem:[%s165 + $0x5c] sm:$0xf]
      %v199 = vld [vmem:[%s165 + $0x60] sm:$0xf]
      %v200 = vld [vmem:[%s165 + $0x64] sm:$0xf]
      %v201 = vld [vmem:[%s165 + $0x68] sm:$0xf]
      %v202 = vld [vmem:[%s165 + $0x6c] sm:$0xf]
      %v203 = vld [vmem:[%s165 + $0x70] sm:$0xf]
      %v204 = vld [vmem:[%s165 + $0x74] sm:$0xf]
      %v205 = vld [vmem:[%s165 + $0x78] sm:$0xf]
      %v206 = vld [vmem:[%s165 + $0x7c] sm:$0x1]
      %v210 = vunpack.c.l.b16 %v172
      %v211 = vunpack.c.h.b16 %v172
      %v212 = vunpack.c.l.b16 %v173
      %v213 = vunpack.c.h.b16 %v173
      %v214 = vunpack.c.l.b16 %v174
      %v215 = vunpack.c.h.b16 %v174
      %v216 = vpack.c.b16 %v212, %v210
      %v217 = vpack.c.b16 %v213, %v211
      %v218 = vpack.c.b16 %v214, %v214
      %v219 = vpack.c.b16 %v215, %v215
      %v254 = vunpack.c.l.b16 %v175
      %v255 = vunpack.c.l.b16 %v176
      %v256 = vunpack.c.l.b16 %v177
      %v257 = vunpack.c.l.b16 %v178
      %v258 = vunpack.c.l.b16 %v179
      %v259 = vunpack.c.l.b16 %v180
      %v260 = vunpack.c.l.b16 %v181
      %v261 = vunpack.c.l.b16 %v182
      %v262 = vunpack.c.l.b16 %v183
      %v263 = vunpack.c.l.b16 %v184
      %v264 = vunpack.c.l.b16 %v185
      %v265 = vunpack.c.l.b16 %v186
      %v266 = vunpack.c.l.b16 %v187
      %v267 = vunpack.c.l.b16 %v188
      %v268 = vunpack.c.l.b16 %v189
      %v269 = vunpack.c.l.b16 %v190
      %v270 = vunpack.c.l.b16 %v191
      %v271 = vunpack.c.l.b16 %v192
      %v272 = vunpack.c.l.b16 %v193
      %v273 = vunpack.c.l.b16 %v194
      %v274 = vunpack.c.l.b16 %v195
      %v275 = vunpack.c.l.b16 %v196
      %v276 = vunpack.c.l.b16 %v197
      %v277 = vunpack.c.l.b16 %v198
      %v278 = vunpack.c.l.b16 %v199
      %v279 = vunpack.c.l.b16 %v200
      %v280 = vunpack.c.l.b16 %v201
      %v281 = vunpack.c.l.b16 %v202
      %v282 = vunpack.c.l.b16 %v203
      %v283 = vunpack.c.l.b16 %v204
      %v284 = vunpack.c.l.b16 %v205
      %v285 = vunpack.c.l.b16 %v206
      %v286 = vpack.c.b16 %v255, %v254
      %v287 = vpack.c.b16 %v257, %v256
      %v288 = vpack.c.b16 %v259, %v258
      %v289 = vpack.c.b16 %v261, %v260
      %v290 = vpack.c.b16 %v263, %v262
      %v291 = vpack.c.b16 %v265, %v264
      %v292 = vpack.c.b16 %v267, %v266
      %v293 = vpack.c.b16 %v269, %v268
      %v294 = vpack.c.b16 %v271, %v270
      %v295 = vpack.c.b16 %v273, %v272
      %v296 = vpack.c.b16 %v275, %v274
      %v297 = vpack.c.b16 %v277, %v276
      %v298 = vpack.c.b16 %v279, %v278
      %v299 = vpack.c.b16 %v281, %v280
      %v300 = vpack.c.b16 %v283, %v282
      %v301 = vpack.c.b16 %v285, %v284
      %vm317 = vcmask 998400
      %v319 = vsel %vm317, %v217, 0
      %v322 = vsel %vm317, %v219, 0
      %vm324 = vcmask 1044480
      %v326 = vsel %vm324, %v301, 0
      %328 = vmatprep.subr.bf16.mxu0 0
      %329 = vmatpush1.bf16.msra.mxu0 %v286
      %330 = vmatprep.subr.bf16.mxu0 0
      %331 = vmatpush1.bf16.msra.mxu0 %v287
      %332 = vmatprep.subr.bf16.mxu0 0
      %333 = vmatpush1.bf16.msra.mxu0 %v288
      %334 = vmatprep.subr.bf16.mxu0 0
      %335 = vmatpush1.bf16.msra.mxu0 %v289
      %336 = vmatprep.subr.bf16.mxu0 0
      %337 = vmatpush1.bf16.msra.mxu0 %v290
      %338 = vmatprep.subr.bf16.mxu0 0
      %339 = vmatpush1.bf16.msra.mxu0 %v291
      %340 = vmatprep.subr.bf16.mxu0 0
      %341 = vmatpush1.bf16.msra.mxu0 %v292
      %342 = vmatprep.subr.bf16.mxu0 0
      %343 = vmatpush1.bf16.msra.mxu0 %v293
      %344 = vmatprep.subr.bf16.mxu0 0
      %345 = vmatpush1.bf16.msra.mxu0 %v294
      %346 = vmatprep.subr.bf16.mxu0 0
      %347 = vmatpush1.bf16.msra.mxu0 %v295
      %348 = vmatprep.subr.bf16.mxu0 0
      %349 = vmatpush1.bf16.msra.mxu0 %v296
      %350 = vmatprep.subr.bf16.mxu0 0
      %351 = vmatpush1.bf16.msra.mxu0 %v297
      %352 = vmatprep.subr.bf16.mxu0 0
      %353 = vmatpush1.bf16.msra.mxu0 %v298
      %354 = vmatprep.subr.bf16.mxu0 0
      %355 = vmatpush1.bf16.msra.mxu0 %v299
      %356 = vmatprep.subr.bf16.mxu0 0
      %357 = vmatpush1.bf16.msra.mxu0 %v300
      %358 = vmatprep.subr.bf16.mxu0 0
      %359 = vmatpush1.bf16.msra.mxu0 %v326
      %360 = vmatprep.mubr.bf16.mxu0 %v319
      %361 = vmatmul.mubr.bf16.gmra.mrb[0].mxu0 %v216
      %v362 = vpop.f32.mrb[0].mxu0
      %v363 = vadd.f32 0.0, %v362
      %v364 = vpop.f32.mrb[0].mxu0
      %v365 = vpop.f32.mrb[0].mxu0
      %v366 = vadd.f32 0.0, %v365
      %v367 = vpop.f32.mrb[0].mxu0
      %368 = vmatprep.mubr.bf16.mxu0 %v322
      %369 = vmatmul.mubr.bf16.gmra.mrb[0].mxu0 %v218
      %v370 = vpop.f32.mrb[0].mxu0
      %v371 = vadd.f32 0.0, %v370
      %v372 = vpop.f32.mrb[0].mxu0
      %v373 = vpop.f32.mrb[0].mxu0
      %v374 = vpop.f32.mrb[0].mxu0
      %375 = vdwg.mxu0
      %s376 = scalar_lea.vmem %s165, 128
      %v377 = vld [vmem:[%s376] sm:$0xf]
      %v378 = vld [vmem:[%s376 + $0x4] sm:$0xf]
      %v379 = vld [vmem:[%s376 + $0x8] sm:$0xf]
      %v380 = vld [vmem:[%s376 + $0xc] sm:$0xf]
      %v381 = vld [vmem:[%s376 + $0x10] sm:$0xf]
      %v382 = vld [vmem:[%s376 + $0x14] sm:$0xf]
      %v383 = vld [vmem:[%s376 + $0x18] sm:$0xf]
      %v384 = vld [vmem:[%s376 + $0x1c] sm:$0xf]
      %v385 = vld [vmem:[%s376 + $0x20] sm:$0xf]
      %v386 = vld [vmem:[%s376 + $0x24] sm:$0xf]
      %v387 = vld [vmem:[%s376 + $0x28] sm:$0xf]
      %v388 = vld [vmem:[%s376 + $0x2c] sm:$0xf]
      %v389 = vld [vmem:[%s376 + $0x30] sm:$0xf]
      %v390 = vld [vmem:[%s376 + $0x34] sm:$0xf]
      %v391 = vld [vmem:[%s376 + $0x38] sm:$0xf]
      %v392 = vld [vmem:[%s376 + $0x3c] sm:$0xf]
      %v393 = vld [vmem:[%s376 + $0x40] sm:$0xf]
      %v394 = vld [vmem:[%s376 + $0x44] sm:$0xf]
      %v395 = vld [vmem:[%s376 + $0x48] sm:$0xf]
      %v396 = vld [vmem:[%s376 + $0x4c] sm:$0xf]
      %v397 = vld [vmem:[%s376 + $0x50] sm:$0xf]
      %v398 = vld [vmem:[%s376 + $0x54] sm:$0xf]
      %v399 = vld [vmem:[%s376 + $0x58] sm:$0xf]
      %v400 = vld [vmem:[%s376 + $0x5c] sm:$0xf]
      %v401 = vld [vmem:[%s376 + $0x60] sm:$0xf]
      %v402 = vld [vmem:[%s376 + $0x64] sm:$0xf]
      %v403 = vld [vmem:[%s376 + $0x68] sm:$0xf]
      %v404 = vld [vmem:[%s376 + $0x6c] sm:$0xf]
      %v405 = vld [vmem:[%s376 + $0x70] sm:$0xf]
      %v406 = vld [vmem:[%s376 + $0x74] sm:$0xf]
      %v407 = vld [vmem:[%s376 + $0x78] sm:$0xf]
      %v408 = vld [vmem:[%s376 + $0x7c] sm:$0x1]
      %v441 = vunpack.c.l.b16 %v377
      %v442 = vunpack.c.l.b16 %v378
      %v443 = vunpack.c.l.b16 %v379
      %v444 = vunpack.c.l.b16 %v380
      %v445 = vunpack.c.l.b16 %v381
      %v446 = vunpack.c.l.b16 %v382
      %v447 = vunpack.c.l.b16 %v383
      %v448 = vunpack.c.l.b16 %v384
      %v449 = vunpack.c.l.b16 %v385
      %v450 = vunpack.c.l.b16 %v386
      %v451 = vunpack.c.l.b16 %v387
      %v452 = vunpack.c.l.b16 %v388
      %v453 = vunpack.c.l.b16 %v389
      %v454 = vunpack.c.l.b16 %v390
      %v455 = vunpack.c.l.b16 %v391
      %v456 = vunpack.c.l.b16 %v392
      %v457 = vunpack.c.l.b16 %v393
      %v458 = vunpack.c.l.b16 %v394
      %v459 = vunpack.c.l.b16 %v395
      %v460 = vunpack.c.l.b16 %v396
      %v461 = vunpack.c.l.b16 %v397
      %v462 = vunpack.c.l.b16 %v398
      %v463 = vunpack.c.l.b16 %v399
      %v464 = vunpack.c.l.b16 %v400
      %v465 = vunpack.c.l.b16 %v401
      %v466 = vunpack.c.l.b16 %v402
      %v467 = vunpack.c.l.b16 %v403
      %v468 = vunpack.c.l.b16 %v404
      %v469 = vunpack.c.l.b16 %v405
      %v470 = vunpack.c.l.b16 %v406
      %v471 = vunpack.c.l.b16 %v407
      %v472 = vunpack.c.l.b16 %v408
      %v473 = vpack.c.b16 %v442, %v441
      %v474 = vpack.c.b16 %v444, %v443
      %v475 = vpack.c.b16 %v446, %v445
      %v476 = vpack.c.b16 %v448, %v447
      %v477 = vpack.c.b16 %v450, %v449
      %v478 = vpack.c.b16 %v452, %v451
      %v479 = vpack.c.b16 %v454, %v453
      %v480 = vpack.c.b16 %v456, %v455
      %v481 = vpack.c.b16 %v458, %v457
      %v482 = vpack.c.b16 %v460, %v459
      %v483 = vpack.c.b16 %v462, %v461
      %v484 = vpack.c.b16 %v464, %v463
      %v485 = vpack.c.b16 %v466, %v465
      %v486 = vpack.c.b16 %v468, %v467
      %v487 = vpack.c.b16 %v470, %v469
      %v488 = vpack.c.b16 %v472, %v471
      %v505 = vsel %vm324, %v488, 0
      %507 = vmatprep.subr.bf16.mxu0 0
      %508 = vmatpush1.bf16.msra.mxu0 %v473
      %509 = vmatprep.subr.bf16.mxu0 0
      %510 = vmatpush1.bf16.msra.mxu0 %v474
      %511 = vmatprep.subr.bf16.mxu0 0
      %512 = vmatpush1.bf16.msra.mxu0 %v475
      %513 = vmatprep.subr.bf16.mxu0 0
      %514 = vmatpush1.bf16.msra.mxu0 %v476
      %515 = vmatprep.subr.bf16.mxu0 0
      %516 = vmatpush1.bf16.msra.mxu0 %v477
      %517 = vmatprep.subr.bf16.mxu0 0
      %518 = vmatpush1.bf16.msra.mxu0 %v478
      %519 = vmatprep.subr.bf16.mxu0 0
      %520 = vmatpush1.bf16.msra.mxu0 %v479
      %521 = vmatprep.subr.bf16.mxu0 0
      %522 = vmatpush1.bf16.msra.mxu0 %v480
      %523 = vmatprep.subr.bf16.mxu0 0
      %524 = vmatpush1.bf16.msra.mxu0 %v481
      %525 = vmatprep.subr.bf16.mxu0 0
      %526 = vmatpush1.bf16.msra.mxu0 %v482
      %527 = vmatprep.subr.bf16.mxu0 0
      %528 = vmatpush1.bf16.msra.mxu0 %v483
      %529 = vmatprep.subr.bf16.mxu0 0
      %530 = vmatpush1.bf16.msra.mxu0 %v484
      %531 = vmatprep.subr.bf16.mxu0 0
      %532 = vmatpush1.bf16.msra.mxu0 %v485
      %533 = vmatprep.subr.bf16.mxu0 0
      %534 = vmatpush1.bf16.msra.mxu0 %v486
      %535 = vmatprep.subr.bf16.mxu0 0
      %536 = vmatpush1.bf16.msra.mxu0 %v487
      %537 = vmatprep.subr.bf16.mxu0 0
      %538 = vmatpush1.bf16.msra.mxu0 %v505
      %539 = vmatprep.mubr.bf16.mxu0 %v319
      %540 = vmatmul.mubr.bf16.gmra.mrb[0].mxu0 %v216
      %v541 = vpop.f32.mrb[0].mxu0
      %v542 = vadd.f32 0.0, %v541
      %v543 = vpop.f32.mrb[0].mxu0
      %v544 = vpop.f32.mrb[0].mxu0
      %v545 = vadd.f32 0.0, %v544
      %v546 = vpop.f32.mrb[0].mxu0
      %547 = vmatprep.mubr.bf16.mxu0 %v322
      %548 = vmatmul.mubr.bf16.gmra.mrb[0].mxu0 %v218
      %v549 = vpop.f32.mrb[0].mxu0
      %v550 = vadd.f32 0.0, %v549
      %v551 = vpop.f32.mrb[0].mxu0
      %v552 = vpop.f32.mrb[0].mxu0
      %v553 = vpop.f32.mrb[0].mxu0
      %554 = vdwg.mxu0
      %v555 = vmax.f32 %v363, %v542
      %v556 = vmax.f32 %v366, %v545
      %v557 = vmax.f32 %v371, %v550
      %s558 = scalar_lea.vmem %s165, 256
      %v559 = vld [vmem:[%s558] sm:$0xf]
      %v560 = vld [vmem:[%s558 + $0x4] sm:$0xf]
      %v561 = vld [vmem:[%s558 + $0x8] sm:$0xf]
      %v562 = vld [vmem:[%s558 + $0xc] sm:$0xf]
      %v563 = vld [vmem:[%s558 + $0x10] sm:$0xf]
      %v564 = vld [vmem:[%s558 + $0x14] sm:$0xf]
      %v565 = vld [vmem:[%s558 + $0x18] sm:$0xf]
      %v566 = vld [vmem:[%s558 + $0x1c] sm:$0xf]
      %v567 = vld [vmem:[%s558 + $0x20] sm:$0xf]
      %v568 = vld [vmem:[%s558 + $0x24] sm:$0xf]
      %v569 = vld [vmem:[%s558 + $0x28] sm:$0xf]
      %v570 = vld [vmem:[%s558 + $0x2c] sm:$0xf]
      %v571 = vld [vmem:[%s558 + $0x30] sm:$0xf]
      %v572 = vld [vmem:[%s558 + $0x34] sm:$0xf]
      %v573 = vld [vmem:[%s558 + $0x38] sm:$0xf]
      %v574 = vld [vmem:[%s558 + $0x3c] sm:$0xf]
      %v575 = vld [vmem:[%s558 + $0x40] sm:$0xf]
      %v576 = vld [vmem:[%s558 + $0x44] sm:$0xf]
      %v577 = vld [vmem:[%s558 + $0x48] sm:$0xf]
      %v578 = vld [vmem:[%s558 + $0x4c] sm:$0xf]
      %v579 = vld [vmem:[%s558 + $0x50] sm:$0xf]
      %v580 = vld [vmem:[%s558 + $0x54] sm:$0xf]
      %v581 = vld [vmem:[%s558 + $0x58] sm:$0xf]
      %v582 = vld [vmem:[%s558 + $0x5c] sm:$0xf]
      %v583 = vld [vmem:[%s558 + $0x60] sm:$0xf]
      %v584 = vld [vmem:[%s558 + $0x64] sm:$0xf]
      %v585 = vld [vmem:[%s558 + $0x68] sm:$0xf]
      %v586 = vld [vmem:[%s558 + $0x6c] sm:$0xf]
      %v587 = vld [vmem:[%s558 + $0x70] sm:$0xf]
      %v588 = vld [vmem:[%s558 + $0x74] sm:$0xf]
      %v589 = vld [vmem:[%s558 + $0x78] sm:$0xf]
      %v590 = vld [vmem:[%s558 + $0x7c] sm:$0x1]
      %v623 = vunpack.c.l.b16 %v559
      %v624 = vunpack.c.l.b16 %v560
      %v625 = vunpack.c.l.b16 %v561
      %v626 = vunpack.c.l.b16 %v562
      %v627 = vunpack.c.l.b16 %v563
      %v628 = vunpack.c.l.b16 %v564
      %v629 = vunpack.c.l.b16 %v565
      %v630 = vunpack.c.l.b16 %v566
      %v631 = vunpack.c.l.b16 %v567
      %v632 = vunpack.c.l.b16 %v568
      %v633 = vunpack.c.l.b16 %v569
      %v634 = vunpack.c.l.b16 %v570
      %v635 = vunpack.c.l.b16 %v571
      %v636 = vunpack.c.l.b16 %v572
      %v637 = vunpack.c.l.b16 %v573
      %v638 = vunpack.c.l.b16 %v574
      %v639 = vunpack.c.l.b16 %v575
      %v640 = vunpack.c.l.b16 %v576
      %v641 = vunpack.c.l.b16 %v577
      %v642 = vunpack.c.l.b16 %v578
      %v643 = vunpack.c.l.b16 %v579
      %v644 = vunpack.c.l.b16 %v580
      %v645 = vunpack.c.l.b16 %v581
      %v646 = vunpack.c.l.b16 %v582
      %v647 = vunpack.c.l.b16 %v583
      %v648 = vunpack.c.l.b16 %v584
      %v649 = vunpack.c.l.b16 %v585
      %v650 = vunpack.c.l.b16 %v586
      %v651 = vunpack.c.l.b16 %v587
      %v652 = vunpack.c.l.b16 %v588
      %v653 = vunpack.c.l.b16 %v589
      %v654 = vunpack.c.l.b16 %v590
      %v655 = vpack.c.b16 %v624, %v623
      %v656 = vpack.c.b16 %v626, %v625
      %v657 = vpack.c.b16 %v628, %v627
      %v658 = vpack.c.b16 %v630, %v629
      %v659 = vpack.c.b16 %v632, %v631
      %v660 = vpack.c.b16 %v634, %v633
      %v661 = vpack.c.b16 %v636, %v635
      %v662 = vpack.c.b16 %v638, %v637
      %v663 = vpack.c.b16 %v640, %v639
      %v664 = vpack.c.b16 %v642, %v641
      %v665 = vpack.c.b16 %v644, %v643
      %v666 = vpack.c.b16 %v646, %v645
      %v667 = vpack.c.b16 %v648, %v647
      %v668 = vpack.c.b16 %v650, %v649
      %v669 = vpack.c.b16 %v652, %v651
      %v670 = vpack.c.b16 %v654, %v653
      %v687 = vsel %vm324, %v670, 0
      %689 = vmatprep.subr.bf16.mxu0 0
      %690 = vmatpush1.bf16.msra.mxu0 %v655
      %691 = vmatprep.subr.bf16.mxu0 0
      %692 = vmatpush1.bf16.msra.mxu0 %v656
      %693 = vmatprep.subr.bf16.mxu0 0
      %694 = vmatpush1.bf16.msra.mxu0 %v657
      %695 = vmatprep.subr.bf16.mxu0 0
      %696 = vmatpush1.bf16.msra.mxu0 %v658
      %697 = vmatprep.subr.bf16.mxu0 0
      %698 = vmatpush1.bf16.msra.mxu0 %v659
      %699 = vmatprep.subr.bf16.mxu0 0
      %700 = vmatpush1.bf16.msra.mxu0 %v660
      %701 = vmatprep.subr.bf16.mxu0 0
      %702 = vmatpush1.bf16.msra.mxu0 %v661
      %703 = vmatprep.subr.bf16.mxu0 0
      %704 = vmatpush1.bf16.msra.mxu0 %v662
      %705 = vmatprep.subr.bf16.mxu0 0
      %706 = vmatpush1.bf16.msra.mxu0 %v663
      %707 = vmatprep.subr.bf16.mxu0 0
      %708 = vmatpush1.bf16.msra.mxu0 %v664
      %709 = vmatprep.subr.bf16.mxu0 0
      %710 = vmatpush1.bf16.msra.mxu0 %v665
      %711 = vmatprep.subr.bf16.mxu0 0
      %712 = vmatpush1.bf16.msra.mxu0 %v666
      %713 = vmatprep.subr.bf16.mxu0 0
      %714 = vmatpush1.bf16.msra.mxu0 %v667
      %715 = vmatprep.subr.bf16.mxu0 0
      %716 = vmatpush1.bf16.msra.mxu0 %v668
      %717 = vmatprep.subr.bf16.mxu0 0
      %718 = vmatpush1.bf16.msra.mxu0 %v669
      %719 = vmatprep.subr.bf16.mxu0 0
      %720 = vmatpush1.bf16.msra.mxu0 %v687
      %721 = vmatprep.mubr.bf16.mxu0 %v319
      %722 = vmatmul.mubr.bf16.gmra.mrb[0].mxu0 %v216
      %v723 = vpop.f32.mrb[0].mxu0
      %v724 = vadd.f32 0.0, %v723
      %v725 = vpop.f32.mrb[0].mxu0
      %v726 = vpop.f32.mrb[0].mxu0
      %v727 = vadd.f32 0.0, %v726
      %v728 = vpop.f32.mrb[0].mxu0
      %729 = vmatprep.mubr.bf16.mxu0 %v322
      %730 = vmatmul.mubr.bf16.gmra.mrb[0].mxu0 %v218
      %v731 = vpop.f32.mrb[0].mxu0
      %v732 = vadd.f32 0.0, %v731
      %v733 = vpop.f32.mrb[0].mxu0
      %v734 = vpop.f32.mrb[0].mxu0
      %v735 = vpop.f32.mrb[0].mxu0
      %736 = vdwg.mxu0
      %v737 = vmax.f32 %v555, %v724
      %v738 = vmax.f32 %v556, %v727
      %v739 = vmax.f32 %v557, %v732
      %s740 = scalar_lea.vmem %s165, 384
      %v741 = vld [vmem:[%s740] sm:$0xf]
      %v742 = vld [vmem:[%s740 + $0x4] sm:$0xf]
      %v743 = vld [vmem:[%s740 + $0x8] sm:$0xf]
      %v744 = vld [vmem:[%s740 + $0xc] sm:$0xf]
      %v745 = vld [vmem:[%s740 + $0x10] sm:$0xf]
      %v746 = vld [vmem:[%s740 + $0x14] sm:$0xf]
      %v747 = vld [vmem:[%s740 + $0x18] sm:$0xf]
      %v748 = vld [vmem:[%s740 + $0x1c] sm:$0xf]
      %v749 = vld [vmem:[%s740 + $0x20] sm:$0xf]
      %v750 = vld [vmem:[%s740 + $0x24] sm:$0xf]
      %v751 = vld [vmem:[%s740 + $0x28] sm:$0xf]
      %v752 = vld [vmem:[%s740 + $0x2c] sm:$0xf]
      %v753 = vld [vmem:[%s740 + $0x30] sm:$0xf]
      %v754 = vld [vmem:[%s740 + $0x34] sm:$0xf]
      %v755 = vld [vmem:[%s740 + $0x38] sm:$0xf]
      %v756 = vld [vmem:[%s740 + $0x3c] sm:$0xf]
      %v757 = vld [vmem:[%s740 + $0x40] sm:$0xf]
      %v758 = vld [vmem:[%s740 + $0x44] sm:$0xf]
      %v759 = vld [vmem:[%s740 + $0x48] sm:$0xf]
      %v760 = vld [vmem:[%s740 + $0x4c] sm:$0xf]
      %v761 = vld [vmem:[%s740 + $0x50] sm:$0xf]
      %v762 = vld [vmem:[%s740 + $0x54] sm:$0xf]
      %v763 = vld [vmem:[%s740 + $0x58] sm:$0xf]
      %v764 = vld [vmem:[%s740 + $0x5c] sm:$0xf]
      %v765 = vld [vmem:[%s740 + $0x60] sm:$0xf]
      %v766 = vld [vmem:[%s740 + $0x64] sm:$0xf]
      %v767 = vld [vmem:[%s740 + $0x68] sm:$0xf]
      %v768 = vld [vmem:[%s740 + $0x6c] sm:$0xf]
      %v769 = vld [vmem:[%s740 + $0x70] sm:$0xf]
      %v770 = vld [vmem:[%s740 + $0x74] sm:$0xf]
      %v771 = vld [vmem:[%s740 + $0x78] sm:$0xf]
      %v772 = vld [vmem:[%s740 + $0x7c] sm:$0x1]
      %v805 = vunpack.c.l.b16 %v741
      %v806 = vunpack.c.l.b16 %v742
      %v807 = vunpack.c.l.b16 %v743
      %v808 = vunpack.c.l.b16 %v744
      %v809 = vunpack.c.l.b16 %v745
      %v810 = vunpack.c.l.b16 %v746
      %v811 = vunpack.c.l.b16 %v747
      %v812 = vunpack.c.l.b16 %v748
      %v813 = vunpack.c.l.b16 %v749
      %v814 = vunpack.c.l.b16 %v750
      %v815 = vunpack.c.l.b16 %v751
      %v816 = vunpack.c.l.b16 %v752
      %v817 = vunpack.c.l.b16 %v753
      %v818 = vunpack.c.l.b16 %v754
      %v819 = vunpack.c.l.b16 %v755
      %v820 = vunpack.c.l.b16 %v756
      %v821 = vunpack.c.l.b16 %v757
      %v822 = vunpack.c.l.b16 %v758
      %v823 = vunpack.c.l.b16 %v759
      %v824 = vunpack.c.l.b16 %v760
      %v825 = vunpack.c.l.b16 %v761
      %v826 = vunpack.c.l.b16 %v762
      %v827 = vunpack.c.l.b16 %v763
      %v828 = vunpack.c.l.b16 %v764
      %v829 = vunpack.c.l.b16 %v765
      %v830 = vunpack.c.l.b16 %v766
      %v831 = vunpack.c.l.b16 %v767
      %v832 = vunpack.c.l.b16 %v768
      %v833 = vunpack.c.l.b16 %v769
      %v834 = vunpack.c.l.b16 %v770
      %v835 = vunpack.c.l.b16 %v771
      %v836 = vunpack.c.l.b16 %v772
      %v837 = vpack.c.b16 %v806, %v805
      %v838 = vpack.c.b16 %v808, %v807
      %v839 = vpack.c.b16 %v810, %v809
      %v840 = vpack.c.b16 %v812, %v811
      %v841 = vpack.c.b16 %v814, %v813
      %v842 = vpack.c.b16 %v816, %v815
      %v843 = vpack.c.b16 %v818, %v817
      %v844 = vpack.c.b16 %v820, %v819
      %v845 = vpack.c.b16 %v822, %v821
      %v846 = vpack.c.b16 %v824, %v823
      %v847 = vpack.c.b16 %v826, %v825
      %v848 = vpack.c.b16 %v828, %v827
      %v849 = vpack.c.b16 %v830, %v829
      %v850 = vpack.c.b16 %v832, %v831
      %v851 = vpack.c.b16 %v834, %v833
      %v852 = vpack.c.b16 %v836, %v835
      %v869 = vsel %vm324, %v852, 0
      %871 = vmatprep.subr.bf16.mxu0 0
      %872 = vmatpush1.bf16.msra.mxu0 %v837
      %873 = vmatprep.subr.bf16.mxu0 0
      %874 = vmatpush1.bf16.msra.mxu0 %v838
      %875 = vmatprep.subr.bf16.mxu0 0
      %876 = vmatpush1.bf16.msra.mxu0 %v839
      %877 = vmatprep.subr.bf16.mxu0 0
      %878 = vmatpush1.bf16.msra.mxu0 %v840
      %879 = vmatprep.subr.bf16.mxu0 0
      %880 = vmatpush1.bf16.msra.mxu0 %v841
      %881 = vmatprep.subr.bf16.mxu0 0
      %882 = vmatpush1.bf16.msra.mxu0 %v842
      %883 = vmatprep.subr.bf16.mxu0 0
      %884 = vmatpush1.bf16.msra.mxu0 %v843
      %885 = vmatprep.subr.bf16.mxu0 0
      %886 = vmatpush1.bf16.msra.mxu0 %v844
      %887 = vmatprep.subr.bf16.mxu0 0
      %888 = vmatpush1.bf16.msra.mxu0 %v845
      %889 = vmatprep.subr.bf16.mxu0 0
      %890 = vmatpush1.bf16.msra.mxu0 %v846
      %891 = vmatprep.subr.bf16.mxu0 0
      %892 = vmatpush1.bf16.msra.mxu0 %v847
      %893 = vmatprep.subr.bf16.mxu0 0
      %894 = vmatpush1.bf16.msra.mxu0 %v848
      %895 = vmatprep.subr.bf16.mxu0 0
      %896 = vmatpush1.bf16.msra.mxu0 %v849
      %897 = vmatprep.subr.bf16.mxu0 0
      %898 = vmatpush1.bf16.msra.mxu0 %v850
      %899 = vmatprep.subr.bf16.mxu0 0
      %900 = vmatpush1.bf16.msra.mxu0 %v851
      %901 = vmatprep.subr.bf16.mxu0 0
      %902 = vmatpush1.bf16.msra.mxu0 %v869
      %903 = vmatprep.mubr.bf16.mxu0 %v319
      %904 = vmatmul.mubr.bf16.gmra.mrb[0].mxu0 %v216
      %v905 = vpop.f32.mrb[0].mxu0
      %v906 = vadd.f32 0.0, %v905
      %v907 = vpop.f32.mrb[0].mxu0
      %v908 = vpop.f32.mrb[0].mxu0
      %v909 = vadd.f32 0.0, %v908
      %v910 = vpop.f32.mrb[0].mxu0
      %911 = vmatprep.mubr.bf16.mxu0 %v322
      %912 = vmatmul.mubr.bf16.gmra.mrb[0].mxu0 %v218
      %v913 = vpop.f32.mrb[0].mxu0
      %v914 = vadd.f32 0.0, %v913
      %v915 = vpop.f32.mrb[0].mxu0
      %v916 = vpop.f32.mrb[0].mxu0
      %v917 = vpop.f32.mrb[0].mxu0
      %918 = vdwg.mxu0
      %v919 = vmax.f32 %v737, %v906
      %v920 = vmax.f32 %v738, %v909
      %v921 = vmax.f32 %v739, %v914
      %v922 = vld [vmem:[%s2] sm:$0xff]
      %v923 = vld [vmem:[%s2 + $0x8] sm:$0xff]
      %v924 = vld [vmem:[%s2 + $0x10] sm:$0xf]
      %926 = vset.pattern.permute.xlu0 0
      %927 = vperm.xlu0 %926, %v922
      %v928 = vpop.permute.xlu0 %927
      %931 = vset.pattern.permute.xlu0 0
      %932 = vperm.xlu0 %931, %v923
      %v933 = vpop.permute.xlu0 %932
      %936 = vset.pattern.permute.xlu0 0
      %937 = vperm.xlu0 %936, %v924
      %v938 = vpop.permute.xlu0 %937
      %v940 = vadd.f32 %v919, %v928
      %v941 = vadd.f32 %v920, %v933
      %v942 = vadd.f32 %v921, %v938
      %v943 = vmax.f32 %v940, 0.0
      %v944 = vmax.f32 %v941, 0.0
      %v945 = vmax.f32 %v942, 0.0
      %v946 = vpack.c.bf16 %v944, %v943
      %v947 = vpack.c.bf16 %v945, %v945
      %v950 = vunpack.c.l.b16 %v946
      %v951 = vunpack.c.h.b16 %v946
      %v952 = vunpack.c.l.b16 %v947
      %v953 = vpack.c.b16 %v950, %v950
      %v954 = vpack.c.b16 %v951, %v951
      %v955 = vpack.c.b16 %v952, %v952
      %vm959 = vcmask 125952
      %960 = vst.msk [vmem:[%s170] sm:$0xf] %vm959, %v953
      %961 = vst.msk [vmem:[%s170 + $0x4] sm:$0xf] %vm959, %v954
      %vm962 = vcmask 123904
      %963 = vst.msk [vmem:[%s170 + $0x8] sm:$0x3] %vm962, %v955
      %p964 = scmp.lt.s32.totalorder %s14, 1
      %s965 = scalar_select %p964, %s14, 1
      %s966 = smul.addr %s965, 3
      %s967 = smul.addr %s966, 4
      %s968 = scalar_lea.vmem %s3, %s967
      // Predicated region
      $region33: #{net_forward.4} parent=31 // pred_check
        %p969 = pneg %p100
      $region34: #{net_forward.4} parent=31 // pred_check_branch
        %971 = sbr.rel (%p969) target = $region36
      $region35: #{net_forward.4} parent=31 // pred_region
        _
      $region36: #{net_forward.4} parent=31 // pred_fallthru
        _
    $region32: #{net_forward.4} parent=5 // pred_fallthru
      _
    %p972 = scmp.le.s32.totalorder 2, %s9
    // Predicated region
    $region37: #{net_forward.4} parent=5 // pred_check
      %p973 = pneg %p972
    $region38: #{net_forward.4} parent=5 // pred_check_branch
      %975 = sbr.rel (%p973) target = $region40
    $region39: #{net_forward.4} parent=5 // pred_region
      %s976 = ssub.s32 %s9, 2
      // Predicated region
      $region41: #{net_forward.4} parent=39 // pred_check
        %p977 = pneg %p106
      $region42: #{net_forward.4} parent=39 // pred_check_branch
        %979 = sbr.rel (%p977) target = $region44
      $region43: #{net_forward.4} parent=39 // pred_region
        %p980 = scmp.lt.s32.totalorder %s15, 1
        %s981 = scalar_select %p980, %s15, 1
        %s982 = smul.addr %s981, 3
        %s983 = smul.addr %s982, 4
        %s984 = scalar_lea.vmem %s3, %s983
      $region44: #{net_forward.4} parent=39 // pred_fallthru
        _
    $region40: #{net_forward.4} parent=5 // pred_fallthru
      _
  $region6: #{net_forward.4} parent=0 // loop_footer
    %s13 = sadd.s32 1, %s9
  $region7: #{net_forward.4} parent=0 // loop_footer_branch
    %8 = sbr.rel target = $region3
  $region8: #{net_forward.4} parent=0 // loop_exit
    _

// kernel: net_forward.5
$region0: #{net_forward.5}
  #allocation0 [shape = 'u32[]', space=smem, size = 0x4, offset = 0x4, fixed_abs, tag = 'smem constant byte address 0x4 - core index']
  #allocation1 [shape = 'u32[144,128]{1,0:T(1,128)}', space=vmem, size = 0x12000, scoped, tag = 'internal scratch']
  %s0 = inlined_call_operand.vmem [shape: bf16[2,320], index: 0, kind: input, shape index: {}]
  %s1 = inlined_call_operand.vmem [shape: bf16[320,50], index: 1, kind: input, shape index: {}]
  %s2 = inlined_call_operand.vmem [shape: f32[1,50], index: 2, kind: input, shape index: {}]
  %s3 = inlined_call_operand.vmem [shape: f32[50,10], index: 3, kind: input, shape index: {}]
  %s4 = inlined_call_operand.vmem [shape: f32[1,10], index: 4, kind: input, shape index: {}]
  %s5 = inlined_call_operand.hbm [shape: f32[2,10], index: 5, kind: output, shape index: {}]
  %s6 = sld [smem:[#allocation0]]
  $region30: #{net_forward.5} parent=0
    _
  %s8 = ssub.s32 1, %s6
  %s9 = scalar_select 0, %s8, %s6
  $region1: #{net_forward.5} parent=0
    #allocation2 [shape = 'u8[1024]{0}', space=vmem, size = 0x400, scoped, tag = 'output window, operand 0, single buffered']
    #allocation3 [shape = 's32[1]{0}', space=sflag, size = 0x4, scoped, tag = 'scoped memory for net_forward.5']
    %10 = vsyncpa [#allocation3], 0
    // Predicated region
    $region2: #{net_forward.5} parent=1 // pred_check
      _
    $region3: #{net_forward.5} parent=1 // pred_check_branch
      %12 = sbr.rel (0) target = $region5
    $region4: #{net_forward.5} parent=1 // pred_region
      _
    $region5: #{net_forward.5} parent=1 // pred_fallthru
      _
    // Predicated region
    $region6: #{net_forward.5} parent=1 // pred_check
      _
    $region7: #{net_forward.5} parent=1 // pred_check_branch
      %14 = sbr.rel (0) target = $region9
    $region8: #{net_forward.5} parent=1 // pred_region
      _
    $region9: #{net_forward.5} parent=1 // pred_fallthru
      _
    // Predicated region
    $region10: #{net_forward.5} parent=1 // pred_check
      _
    $region11: #{net_forward.5} parent=1 // pred_check_branch
      %16 = sbr.rel (0) target = $region13
    $region12: #{net_forward.5} parent=1 // pred_region
      _
    $region13: #{net_forward.5} parent=1 // pred_fallthru
      _
    // Predicated region
    $region14: #{net_forward.5} parent=1 // pred_check
      _
    $region15: #{net_forward.5} parent=1 // pred_check_branch
      %18 = sbr.rel (0) target = $region17
    $region16: #{net_forward.5} parent=1 // pred_region
      _
    $region17: #{net_forward.5} parent=1 // pred_fallthru
      _
    // Predicated region
    $region18: #{net_forward.5} parent=1 // pred_check
      _
    $region19: #{net_forward.5} parent=1 // pred_check_branch
      %20 = sbr.rel (0) target = $region21
    $region20: #{net_forward.5} parent=1 // pred_region
      _
    $region21: #{net_forward.5} parent=1 // pred_fallthru
      _
    %v22 = vld [vmem:[%s0] sm:$0x7]
    %v23 = vld [vmem:[%s1] sm:$0xf]
    %v24 = vld [vmem:[%s1 + $0x4] sm:$0xf]
    %v25 = vld [vmem:[%s1 + $0x8] sm:$0xf]
    %v26 = vld [vmem:[%s1 + $0xc] sm:$0xf]
    %v27 = vld [vmem:[%s1 + $0x10] sm:$0xf]
    %v28 = vld [vmem:[%s1 + $0x14] sm:$0xf]
    %v29 = vld [vmem:[%s1 + $0x18] sm:$0xf]
    %v30 = vld [vmem:[%s1 + $0x1c] sm:$0xf]
    %v31 = vld [vmem:[%s1 + $0x20] sm:$0xf]
    %v32 = vld [vmem:[%s1 + $0x24] sm:$0xf]
    %v33 = vld [vmem:[%s1 + $0x28] sm:$0xf]
    %v34 = vld [vmem:[%s1 + $0x2c] sm:$0xf]
    %v35 = vld [vmem:[%s1 + $0x30] sm:$0xf]
    %v36 = vld [vmem:[%s1 + $0x34] sm:$0xf]
    %v37 = vld [vmem:[%s1 + $0x38] sm:$0xf]
    %v38 = vld [vmem:[%s1 + $0x3c] sm:$0xf]
    %v39 = vld [vmem:[%s1 + $0x40] sm:$0xf]
    %v40 = vld [vmem:[%s1 + $0x44] sm:$0xf]
    %v41 = vld [vmem:[%s1 + $0x48] sm:$0xf]
    %v42 = vld [vmem:[%s1 + $0x4c] sm:$0xf]
    %v43 = vld [vmem:[%s1 + $0x50] sm:$0xf]
    %v44 = vld [vmem:[%s1 + $0x54] sm:$0xf]
    %v45 = vld [vmem:[%s1 + $0x58] sm:$0xf]
    %v46 = vld [vmem:[%s1 + $0x5c] sm:$0xf]
    %v47 = vld [vmem:[%s1 + $0x60] sm:$0xf]
    %v48 = vld [vmem:[%s1 + $0x64] sm:$0xf]
    %v49 = vld [vmem:[%s1 + $0x68] sm:$0xf]
    %v50 = vld [vmem:[%s1 + $0x6c] sm:$0xf]
    %v51 = vld [vmem:[%s1 + $0x70] sm:$0xf]
    %v52 = vld [vmem:[%s1 + $0x74] sm:$0xf]
    %v53 = vld [vmem:[%s1 + $0x78] sm:$0xf]
    %v54 = vld [vmem:[%s1 + $0x7c] sm:$0xf]
    %v55 = vld [vmem:[%s1 + $0x80] sm:$0xf]
    %v56 = vld [vmem:[%s1 + $0x84] sm:$0xf]
    %v57 = vld [vmem:[%s1 + $0x88] sm:$0xf]
    %v58 = vld [vmem:[%s1 + $0x8c] sm:$0xf]
    %v59 = vld [vmem:[%s1 + $0x90] sm:$0xf]
    %v60 = vld [vmem:[%s1 + $0x94] sm:$0xf]
    %v61 = vld [vmem:[%s1 + $0x98] sm:$0xf]
    %v62 = vld [vmem:[%s1 + $0x9c] sm:$0xf]
    %v63 = vld [vmem:[%s2] sm:$0x1]
    %v65 = vlaneseq
    %v66 = vshrl.u32 %v65, 7
    %v67 = vsub.s32 0, %v66
    %v68 = vrot.slane %v63, %v67
    %v72 = vunpack.c.l.s4 1966171168
    %v73 = vunpack.c.0.s8 %v72
    %v74 = vlaneseq
    %v75 = vshrl.u32 %v74, 7
    %v76 = vsub.s32 %v73, %v75
    %v77 = vrot.slane %v22, %v76
    %v78 = vcombine.high %v77, %v77
    %v80 = vunpack.c.l.s4 1966171168
    %v81 = vunpack.c.0.s8 %v80
    %v82 = vlaneseq
    %v83 = vshrl.u32 %v82, 7
    %v84 = vsub.s32 %v81, %v83
    %v85 = vrot.slane %v77, %v84
    %v87 = vunpack.c.l.s4 1966171168
    %v88 = vunpack.c.0.s8 %v87
    %v89 = vlaneseq
    %v90 = vshrl.u32 %v89, 7
    %v91 = vsub.s32 %v88, %v90
    %v92 = vrot.slane %v78, %v91
    %v93 = vcombine.high %v85, %v85
    %v136 = vunpack.c.l.b16 %v23
    %v137 = vunpack.c.l.b16 %v24
    %v138 = vunpack.c.l.b16 %v25
    %v139 = vunpack.c.l.b16 %v26
    %v140 = vunpack.c.l.b16 %v27
    %v141 = vunpack.c.l.b16 %v28
    %v142 = vunpack.c.l.b16 %v29
    %v143 = vunpack.c.l.b16 %v30
    %v144 = vunpack.c.l.b16 %v31
    %v145 = vunpack.c.l.b16 %v32
    %v146 = vunpack.c.l.b16 %v33
    %v147 = vunpack.c.l.b16 %v34
    %v148 = vunpack.c.l.b16 %v35
    %v149 = vunpack.c.l.b16 %v36
    %v150 = vunpack.c.l.b16 %v37
    %v151 = vunpack.c.l.b16 %v38
    %v152 = vunpack.c.l.b16 %v39
    %v153 = vunpack.c.l.b16 %v40
    %v154 = vunpack.c.l.b16 %v41
    %v155 = vunpack.c.l.b16 %v42
    %v156 = vunpack.c.l.b16 %v43
    %v157 = vunpack.c.l.b16 %v44
    %v158 = vunpack.c.l.b16 %v45
    %v159 = vunpack.c.l.b16 %v46
    %v160 = vunpack.c.l.b16 %v47
    %v161 = vunpack.c.l.b16 %v48
    %v162 = vunpack.c.l.b16 %v49
    %v163 = vunpack.c.l.b16 %v50
    %v164 = vunpack.c.l.b16 %v51
    %v165 = vunpack.c.l.b16 %v52
    %v166 = vunpack.c.l.b16 %v53
    %v167 = vunpack.c.l.b16 %v54
    %v168 = vunpack.c.l.b16 %v55
    %v169 = vunpack.c.l.b16 %v56
    %v170 = vunpack.c.l.b16 %v57
    %v171 = vunpack.c.l.b16 %v58
    %v172 = vunpack.c.l.b16 %v59
    %v173 = vunpack.c.l.b16 %v60
    %v174 = vunpack.c.l.b16 %v61
    %v175 = vunpack.c.l.b16 %v62
    %v176 = vpack.c.b16 %v137, %v136
    %v177 = vpack.c.b16 %v139, %v138
    %v178 = vpack.c.b16 %v141, %v140
    %v179 = vpack.c.b16 %v143, %v142
    %v180 = vpack.c.b16 %v145, %v144
    %v181 = vpack.c.b16 %v147, %v146
    %v182 = vpack.c.b16 %v149, %v148
    %v183 = vpack.c.b16 %v151, %v150
    %v184 = vpack.c.b16 %v153, %v152
    %v185 = vpack.c.b16 %v155, %v154
    %v186 = vpack.c.b16 %v157, %v156
    %v187 = vpack.c.b16 %v159, %v158
    %v188 = vpack.c.b16 %v161, %v160
    %v189 = vpack.c.b16 %v163, %v162
    %v190 = vpack.c.b16 %v165, %v164
    %v191 = vpack.c.b16 %v167, %v166
    %v192 = vpack.c.b16 %v169, %v168
    %v193 = vpack.c.b16 %v171, %v170
    %v194 = vpack.c.b16 %v173, %v172
    %v195 = vpack.c.b16 %v175, %v174
    %vm216 = vcmask 523264
    %v218 = vsel %vm216, %v93, 0
    %220 = vmatprep.subr.bf16.mxu0 0
    %221 = vmatpush1.bf16.msra.mxu0 %v176
    %222 = vmatprep.subr.bf16.mxu0 0
    %223 = vmatpush1.bf16.msra.mxu0 %v177
    %224 = vmatprep.subr.bf16.mxu0 0
    %225 = vmatpush1.bf16.msra.mxu0 %v178
    %226 = vmatprep.subr.bf16.mxu0 0
    %227 = vmatpush1.bf16.msra.mxu0 %v179
    %228 = vmatprep.subr.bf16.mxu0 0
    %229 = vmatpush1.bf16.msra.mxu0 %v180
    %230 = vmatprep.subr.bf16.mxu0 0
    %231 = vmatpush1.bf16.msra.mxu0 %v181
    %232 = vmatprep.subr.bf16.mxu0 0
    %233 = vmatpush1.bf16.msra.mxu0 %v182
    %234 = vmatprep.subr.bf16.mxu0 0
    %235 = vmatpush1.bf16.msra.mxu0 %v183
    %236 = vmatprep.subr.bf16.mxu0 0
    %237 = vmatpush1.bf16.msra.mxu0 %v184
    %238 = vmatprep.subr.bf16.mxu0 0
    %239 = vmatpush1.bf16.msra.mxu0 %v185
    %240 = vmatprep.subr.bf16.mxu0 0
    %241 = vmatpush1.bf16.msra.mxu0 %v186
    %242 = vmatprep.subr.bf16.mxu0 0
    %243 = vmatpush1.bf16.msra.mxu0 %v187
    %244 = vmatprep.subr.bf16.mxu0 0
    %245 = vmatpush1.bf16.msra.mxu0 %v188
    %246 = vmatprep.subr.bf16.mxu0 0
    %247 = vmatpush1.bf16.msra.mxu0 %v189
    %248 = vmatprep.subr.bf16.mxu0 0
    %249 = vmatpush1.bf16.msra.mxu0 %v190
    %250 = vmatprep.subr.bf16.mxu0 0
    %251 = vmatpush1.bf16.msra.mxu0 %v191
    %252 = vmatprep.mubr.bf16.mxu0 %v92
    %253 = vmatmul.mubr.bf16.gmra.mrb[0].mxu0 %v85
    %v254 = vpop.f32.mrb[0].mxu0
    %v255 = vadd.f32 %v68, %v254
    %v256 = vpop.f32.mrb[0].mxu0
    %v257 = vpop.f32.mrb[0].mxu0
    %v258 = vpop.f32.mrb[0].mxu0
    %259 = vdwg.mxu0
    %260 = vmatprep.subr.bf16.mxu0 0
    %261 = vmatpush1.bf16.msra.mxu0 %v192
    %262 = vmatprep.subr.bf16.mxu0 0
    %263 = vmatpush1.bf16.msra.mxu0 %v193
    %264 = vmatprep.subr.bf16.mxu0 0
    %265 = vmatpush1.bf16.msra.mxu0 %v194
    %266 = vmatprep.subr.bf16.mxu0 0
    %267 = vmatpush1.bf16.msra.mxu0 %v195
    %268 = vmatprep.subr.bf16.mxu0 0
    %269 = vmatpush1.bf16.msra.mxu0 0
    %270 = vmatprep.subr.bf16.mxu0 0
    %271 = vmatpush1.bf16.msra.mxu0 0
    %272 = vmatprep.subr.bf16.mxu0 0
    %273 = vmatpush1.bf16.msra.mxu0 0
    %274 = vmatprep.subr.bf16.mxu0 0
    %275 = vmatpush1.bf16.msra.mxu0 0
    %276 = vmatprep.subr.bf16.mxu0 0
    %277 = vmatpush1.bf16.msra.mxu0 0
    %278 = vmatprep.subr.bf16.mxu0 0
    %279 = vmatpush1.bf16.msra.mxu0 0
    %280 = vmatprep.subr.bf16.mxu0 0
    %281 = vmatpush1.bf16.msra.mxu0 0
    %282 = vmatprep.subr.bf16.mxu0 0
    %283 = vmatpush1.bf16.msra.mxu0 0
    %284 = vmatprep.subr.bf16.mxu0 0
    %285 = vmatpush1.bf16.msra.mxu0 0
    %286 = vmatprep.subr.bf16.mxu0 0
    %287 = vmatpush1.bf16.msra.mxu0 0
    %288 = vmatprep.subr.bf16.mxu0 0
    %289 = vmatpush1.bf16.msra.mxu0 0
    %290 = vmatprep.subr.bf16.mxu0 0
    %291 = vmatpush1.bf16.msra.mxu0 0
    %292 = vmatprep.mubr.bf16.mxu0 0
    %293 = vmatmul.mubr.bf16.gmra.mrb[0].mxu0 %v218
    %v294 = vpop.f32.mrb[0].mxu0
    %v295 = vadd.f32 %v255, %v294
    %v296 = vpop.f32.mrb[0].mxu0
    %v297 = vpop.f32.mrb[0].mxu0
    %v298 = vpop.f32.mrb[0].mxu0
    %299 = vdwg.mxu0
    %v300 = vmax.f32 %v295, 0.0
    %v301 = vld [vmem:[%s3] sm:$0xff]
    %v302 = vld [vmem:[%s3 + $0x8] sm:$0xff]
    %v303 = vld [vmem:[%s3 + $0x10] sm:$0xff]
    %v304 = vld [vmem:[%s3 + $0x18] sm:$0xff]
    %v305 = vld [vmem:[%s3 + $0x20] sm:$0xff]
    %v306 = vld [vmem:[%s3 + $0x28] sm:$0xff]
    %v307 = vld [vmem:[%s3 + $0x30] sm:$0x3]
    %v308 = vld [vmem:[%s4] sm:$0x1]
    %v310 = vlaneseq
    %v311 = vshrl.u32 %v310, 7
    %v312 = vsub.s32 0, %v311
    %v313 = vrot.slane %v308, %v312
    %vm315 = vcmask 408576
    %v317 = vsel %vm315, %v300, 0
    %vm319 = vcmask 1041408
    %v321 = vsel %vm319, %v307, 0
    %323 = vmatprep.subr.mxu0 0.0
    %324 = vmatpush1.msra.mxu0 %v301
    %325 = vmatprep.subr.mxu0 0.0
    %326 = vmatpush1.msra.mxu0 %v302
    %327 = vmatprep.subr.mxu0 0.0
    %328 = vmatpush1.msra.mxu0 %v303
    %329 = vmatprep.subr.mxu0 0.0
    %330 = vmatpush1.msra.mxu0 %v304
    %331 = vmatprep.subr.mxu0 0.0
    %332 = vmatpush1.msra.mxu0 %v305
    %333 = vmatprep.subr.mxu0 0.0
    %334 = vmatpush1.msra.mxu0 %v306
    %335 = vmatprep.subr.mxu0 0.0
    %336 = vmatpush1.msra.mxu0 %v321
    %337 = vmatprep.subr.mxu0 0.0
    %338 = vmatpush1.msra.mxu0 0.0
    %339 = vmatprep.subr.mxu0 0.0
    %340 = vmatpush1.msra.mxu0 0.0
    %341 = vmatprep.subr.mxu0 0.0
    %342 = vmatpush1.msra.mxu0 0.0
    %343 = vmatprep.subr.mxu0 0.0
    %344 = vmatpush1.msra.mxu0 0.0
    %345 = vmatprep.subr.mxu0 0.0
    %346 = vmatpush1.msra.mxu0 0.0
    %347 = vmatprep.subr.mxu0 0.0
    %348 = vmatpush1.msra.mxu0 0.0
    %349 = vmatprep.subr.mxu0 0.0
    %350 = vmatpush1.msra.mxu0 0.0
    %351 = vmatprep.subr.mxu0 0.0
    %352 = vmatpush1.msra.mxu0 0.0
    %353 = vmatprep.subr.mxu0 0.0
    %354 = vmatpush1.msra.mxu0 0.0
    %355 = vmatprep.subr.mxu0 0.0
    %356 = vmatpush1.msra.mxu0 0.0
    %357 = vmatprep.subr.mxu0 0.0
    %358 = vmatpush1.msra.mxu0 0.0
    %359 = vmatprep.subr.mxu0 0.0
    %360 = vmatpush1.msra.mxu0 0.0
    %361 = vmatprep.subr.mxu0 0.0
    %362 = vmatpush1.msra.mxu0 0.0
    %363 = vmatprep.subr.mxu0 0.0
    %364 = vmatpush1.msra.mxu0 0.0
    %365 = vmatprep.subr.mxu0 0.0
    %366 = vmatpush1.msra.mxu0 0.0
    %367 = vmatprep.subr.mxu0 0.0
    %368 = vmatpush1.msra.mxu0 0.0
    %369 = vmatprep.subr.mxu0 0.0
    %370 = vmatpush1.msra.mxu0 0.0
    %371 = vmatprep.subr.mxu0 0.0
    %372 = vmatpush1.msra.mxu0 0.0
    %373 = vmatprep.subr.mxu0 0.0
    %374 = vmatpush1.msra.mxu0 0.0
    %375 = vmatprep.subr.mxu0 0.0
    %376 = vmatpush1.msra.mxu0 0.0
    %377 = vmatprep.subr.mxu0 0.0
    %378 = vmatpush1.msra.mxu0 0.0
    %379 = vmatprep.subr.mxu0 0.0
    %380 = vmatpush1.msra.mxu0 0.0
    %381 = vmatprep.subr.mxu0 0.0
    %382 = vmatpush1.msra.mxu0 0.0
    %383 = vmatprep.subr.mxu0 0.0
    %384 = vmatpush1.msra.mxu0 0.0
    %385 = vmatprep.subr.mxu0 0.0
    %386 = vmatpush1.msra.mxu0 0.0
    %387 = vmatprep.mubr.f32.mxu0 0.0
    %388 = vmatmul.mubr.f32.gmra.mrb[0].mxu0 %v317
    %v389 = vpop.f32.mrb[0].mxu0
    %v390 = vadd.f32 %v313, %v389
    %v391 = vpop.f32.mrb[0].mxu0
    %392 = vdwg.mxu0
    %vm393 = vcmask 74752
    %v394 = vsel %vm393, %v390, -inf
    %395 = vmax.xlane.f32.xlu0 %v394
    %v396 = vpop.xlane.xlu0 %395
    %v397 = vsub.f32 %v390, %v396
    %v398 = vmul.f32 %v397, 1.442695
    %v399 = vpow.pop %v398
    %v400 = vsel %vm393, %v399, 0.0
    %401 = vadd.xlane.f32.xlu0 %v400
    %v402 = vpop.xlane.xlu0 %401
    %v403 = vlog2.pop %v402
    %v404 = vmul.f32 %v403, 0.6931472
    %v405 = vsub.f32 %v397, %v404
    %406 = vst.msk [vmem:[#allocation2] sm:$0x3] %vm393, %v405
    // Predicated region
    $region22: #{net_forward.5} parent=1 // pred_check
      _
    $region23: #{net_forward.5} parent=1 // pred_check_branch
      %408 = sbr.rel (0) target = $region25
    $region24: #{net_forward.5} parent=1 // pred_region
      %s410 = ssub.s32 32, 32
      %411 = vsyncadd [#allocation3], %s410
      %s413 = sshll.u32 [#allocation2], 4
      %s414 = int_to_ptr.vmem [resolvable:$true] %s413
      %416 = dma.vmem_to_hbm [thread:$0]  %s414, 32, %s5, [#allocation3]
    $region25: #{net_forward.5} parent=1 // pred_fallthru
      _
    // Predicated region
    $region26: #{net_forward.5} parent=1 // pred_check
      _
    $region27: #{net_forward.5} parent=1 // pred_check_branch
      %418 = sbr.rel (0) target = $region29
    $region28: #{net_forward.5} parent=1 // pred_region
      %419 = dma.done [#allocation3], 32
    $region29: #{net_forward.5} parent=1 // pred_fallthru
      _
    %420 = vsyncpa [#allocation3], 1

</llo_original>
